<compile_context>
chip_gen: v5e
topology: v5e:2x2
jax: 0.10.0
libtpu: 0.0.40
codegen_flags: <defaults>
</compile_context>

<pallas_src>
import math

import jax
import jax.numpy as jnp
from jax import lax
from jax.experimental import pallas as pl
from jax.experimental.pallas import tpu as pltpu

LRELU_SLOPE = 0.2
IN_EPS = 1e-5


# ------------------------------ Pallas kernel ------------------------------ #

def _make_fused_disc_kernel(*, Bb, Ho0, Wo0, C0, C1, Hq0, eps, slope):
    """conv(4,s2,p1)+LReLU -> conv(4,s2,p1)+InstanceNorm+LReLU -> conv(4,s1,p0)."""
    M0 = Ho0 * Wo0
    Hc, Wc = Ho0 // 2, Wo0 // 2          # layer-1 output spatial (per-phase extent)
    Ho1, Wo1 = Hc, Wc
    M1 = Ho1 * Wo1
    K1 = 16 * C0

    def kernel(a0_ref, w0_ref, w1_ref, g1_ref, b1_ref, wf_ref, o_ref,
               s0_ref, a1_ref):
        K0 = a0_ref.shape[-1]

        # ---- layer 0: one bf16 MXU matmul (im2col prebuilt in XLA) + LReLU ----
        a0 = a0_ref[...].reshape(Bb * M0, K0)       # drop/merge leading dim only
        acc0 = jnp.dot(a0, w0_ref[...], preferred_element_type=jnp.float32)
        y0 = jnp.where(acc0 >= 0.0, acc0, slope * acc0).astype(jnp.bfloat16)

        # ---- scatter layer-0 output into the 4-phase-split, zero-padded VMEM
        #      scratch.  A0 rows are pre-grouped by output phase
        #      (pi, pj) = ((i+1)%2, (j+1)%2), so each group is a contiguous
        #      block of y0 rows; pad borders stay zero from the memset below.
        s0_ref[...] = jnp.zeros_like(s0_ref)        # few KB; keeps pad rows/cols 0
        for bb in range(Bb):
            for gidx in range(4):
                pi, pj = gidx // 2, gidx % 2
                r0, c0 = 1 - pi, 1 - pj
                base = bb * M0 + gidx * M1
                for rr in range(Hc):
                    s0_ref[bb, gidx * Hq0 + r0 + rr, pl.ds(c0, Wc), :] = (
                        y0[base + rr * Wc:base + (rr + 1) * Wc, :])

        # ---- layer-1 im2col from the phase-split scratch: one contiguous
        #      (Ho1, Wo1, C0) read per tap, row-wise stores into the A1 tile.
        for bb in range(Bb):
            for di in range(4):
                pi, bi = di % 2, di // 2
                for dj in range(4):
                    pj, bj = dj % 2, dj // 2
                    col0 = (di * 4 + dj) * C0
                    src = s0_ref[bb, pl.ds((pi * 2 + pj) * Hq0 + bi, Ho1),
                                 pl.ds(bj, Wo1), :]
                    for i1 in range(Ho1):
                        a1_ref[bb, pl.ds(i1 * Wo1, Wo1), pl.ds(col0, C0)] = src[i1]

        # ---- layer 1: bf16 matmul + InstanceNorm(affine) + LReLU, with the
        #      final 4x4/s1 conv folded in as an f32 multiply-reduce epilogue
        #      (the last feature map never leaves VMEM; no N=1 matmul).
        a1 = a1_ref[...].reshape(Bb * M1, K1)
        acc1 = jnp.dot(a1, w1_ref[...], preferred_element_type=jnp.float32)
        g1, b1, wf = g1_ref[...], b1_ref[...], wf_ref[...]
        for bb in range(Bb):
            ys = acc1[bb * M1:(bb + 1) * M1, :]                      # (M1, C1)
            mean = jnp.mean(ys, axis=0, keepdims=True)
            xc = ys - mean
            var = jnp.mean(xc * xc, axis=0, keepdims=True)           # biased var
            ys = xc * lax.rsqrt(var + eps) * g1 + b1
            ys = jnp.where(ys >= 0.0, ys, slope * ys)
            z = jnp.sum(ys * wf, axis=1, keepdims=True)              # (M1, 1)
            z = jnp.sum(z, axis=0, keepdims=True)                    # (1, 1)
            o_ref[bb] = z.astype(o_ref.dtype)

    return kernel


# --------------------------- XLA-side preparation --------------------------- #

def _im2col_s2_phase_grouped(x_nhwc):
    """im2col for conv(k=4, s=2, p=1); tiny (only used for the network input).

    Rows are grouped by output phase ((i+1)%2, (j+1)%2) so the kernel can
    scatter the conv result into a phase-split padded scratch with contiguous
    copies.  Returns bf16 (B, Ho*Wo, 16*Cin) with K ordered (di, dj, c).
    """
    B, H, W, Cin = x_nhwc.shape
    Ho, Wo = H // 2, W // 2
    xpad = jnp.pad(x_nhwc, ((0, 0), (1, 1), (1, 1), (0, 0)))
    taps = []
    for di in range(4):
        for dj in range(4):
            taps.append(xpad[:, di:di + 2 * Ho - 1:2, dj:dj + 2 * Wo - 1:2, :])
    a = jnp.concatenate(taps, axis=-1)                        # (B, Ho, Wo, 16*Cin)
    a = a.reshape(B, Ho // 2, 2, Wo // 2, 2, 16 * Cin)
    a = jnp.transpose(a, (0, 2, 4, 1, 3, 5))                  # (B, i%2, j%2, ., ., K)
    a = a[:, ::-1, ::-1]                                      # group order gidx 0..3
    return a.reshape(B, Ho * Wo, 16 * Cin).astype(jnp.bfloat16)


def prepare_kernel_params(params, num_layers):
    """Precompute (once, outside the forward path) all kernel-side weights:
    matmul layout + bf16 cast.  No channel/K padding: activations stay in
    VMEM, so 128-padding would only waste MXU work and scratch."""
    assert num_layers == 2, "fused kernel covers image_size == 16 only"
    w0 = params["conv0"]                                 # (C0, Cin, 4, 4)
    w1 = params["conv1"]                                 # (C1, C0, 4, 4)
    wf = params["conv_final"]                            # (1,  C1, 4, 4)
    C0, Cin = w0.shape[0], w0.shape[1]
    C1 = w1.shape[0]
    assert w1.shape[1] == C0 and wf.shape[1] == C1
    return {
        # rows ordered (di, dj, c) -- matches the im2col K ordering
        "w0": jnp.transpose(w0, (2, 3, 1, 0)).reshape(16 * Cin, C0)
                 .astype(jnp.bfloat16),
        "w1": jnp.transpose(w1, (2, 3, 1, 0)).reshape(16 * C0, C1)
                 .astype(jnp.bfloat16),
        "g1": params["in1_g"].astype(jnp.float32).reshape(1, C1),
        "b1": params["in1_b"].astype(jnp.float32).reshape(1, C1),
        # final 4x4/s1/p0 conv, row m = i*4 + j (matches the A1 row order)
        "wf": jnp.transpose(wf[0], (1, 2, 0)).reshape(16, C1).astype(jnp.float32),
    }


def spectral_normalize(w_oihw, key, n_iter=50):
    """W / sigma_max(W.reshape(Cout, -1)) via converged power iteration.

    TODO(synk): PyTorch keeps a persistent `u` buffer and does 1 power
    iteration per forward; this converged sigma is what that approaches, not a
    bit-exact reproduction of the torch state mid-training.
    """
    m = w_oihw.reshape(w_oihw.shape[0], -1)
    u = jax.random.normal(key, (m.shape[0],), jnp.float32)
    u = u / (jnp.linalg.norm(u) + 1e-12)
    v = jnp.zeros((m.shape[1],), jnp.float32)
    for _ in range(n_iter):
        v = m.T @ u
        v = v / (jnp.linalg.norm(v) + 1e-12)
        u = m @ v
        u = u / (jnp.linalg.norm(u) + 1e-12)
    sigma = u @ (m @ v)
    return w_oihw / sigma


# ---------------------------------- forward --------------------------------- #

def discriminator_forward(x_nchw, kparams):
    """Fused forward pass; returns (B, 1, 1, 1) logits like the torch module."""
    B, Cin, H, W = x_nchw.shape
    assert H == W and H == 16, (
        "only the fused 2-conv-layer topology (image_size == 16) is implemented")
    Ho0, Wo0 = H // 2, W // 2
    Hc, Wc = Ho0 // 2, Wo0 // 2
    assert Hc == 4 and Wc == 4           # final 4x4/s1 conv covers the whole map
    Hq0, Wq0 = Hc + 1, Wc + 1

    w0, w1 = kparams["w0"], kparams["w1"]
    g1, b1, wf = kparams["g1"], kparams["b1"], kparams["wf"]
    K0, C0 = w0.shape
    K1, C1 = w1.shape
    assert K0 == 16 * Cin and K1 == 16 * C0 and wf.shape == (16, C1)

    M0, M1 = Ho0 * Wo0, Hc * Wc
    # >= 2 "parallel" grid steps keep both v7x TensorCores busy; the per-step
    # batch block is folded into the matmul M dimension.
    G = 2 if (B >= 2 and B % 2 == 0) else 1
    Bb = B // G

    a0 = _im2col_s2_phase_grouped(
        jnp.transpose(x_nchw, (0, 2, 3, 1)).astype(jnp.float32))

    kernel = _make_fused_disc_kernel(
        Bb=Bb, Ho0=Ho0, Wo0=Wo0, C0=C0, C1=C1, Hq0=Hq0,
        eps=IN_EPS, slope=LRELU_SLOPE)

    out = pl.pallas_call(
        kernel,
        out_shape=jax.ShapeDtypeStruct((B, 1, 1), jnp.float32),
        grid=(G,),
        in_specs=[
            pl.BlockSpec((Bb, M0, K0), lambda g: (g, 0, 0)),
            pl.BlockSpec((K0, C0), lambda g: (0, 0)),
            pl.BlockSpec((K1, C1), lambda g: (0, 0)),
            pl.BlockSpec((1, C1), lambda g: (0, 0)),
            pl.BlockSpec((1, C1), lambda g: (0, 0)),
            pl.BlockSpec((M1, C1), lambda g: (0, 0)),
        ],
        out_specs=pl.BlockSpec((Bb, 1, 1), lambda g: (g, 0, 0)),
        scratch_shapes=[
            pltpu.VMEM((Bb, 4 * Hq0, Wq0, C0), jnp.bfloat16),   # phase-split act
            pltpu.VMEM((Bb, M1, K1), jnp.bfloat16),             # layer-1 A tile
        ],
        compiler_params=pltpu.CompilerParams(
            dimension_semantics=("parallel",),
            vmem_limit_bytes=32 * 1024 * 1024),
    )(a0, w0, w1, g1, b1, wf)
    return out.reshape(B, 1, 1, 1)


# --------------------------------- reference -------------------------------- #

def reference_forward(x_nchw, params, num_layers):
    """Pure-JAX reference (bf16 convs, f32 accumulation, like the kernel)."""
    def conv(x, w, stride, pad):
        return lax.conv_general_dilated(
            x.astype(jnp.bfloat16), w.astype(jnp.bfloat16),
            window_strides=(stride, stride),
            padding=[(pad, pad), (pad, pad)],
            dimension_numbers=("NCHW", "OIHW", "NCHW"),
            preferred_element_type=jnp.float32)

    def lrelu(v):
        return jnp.where(v >= 0, v, LRELU_SLOPE * v)

    x = lrelu(conv(x_nchw, params["conv0"], 2, 1))
    for i in range(1, num_layers):
        x = conv(x, params[f"conv{i}"], 2, 1)
        mean = jnp.mean(x, axis=(2, 3), keepdims=True)
        var = jnp.mean((x - mean) ** 2, axis=(2, 3), keepdims=True)
        g = params[f"in{i}_g"].reshape(1, -1, 1, 1)
        b = params[f"in{i}_b"].reshape(1, -1, 1, 1)
        x = lrelu((x - mean) * lax.rsqrt(var + IN_EPS) * g + b)
    return lax.conv_general_dilated(
        x, params["conv_final"], window_strides=(1, 1),
        padding=[(0, 0), (0, 0)],
        dimension_numbers=("NCHW", "OIHW", "NCHW"),
        precision=lax.Precision.HIGHEST)


# ----------------------------------- main ----------------------------------- #

if __name__ == "__main__":
    B, channels, feature_maps, image_size = 2, 3, 16, 16
    num_layers = int(math.log2(image_size)) - 2          # = 2 for image_size=16

    key = jax.random.PRNGKey(0)
    keys = jax.random.split(key, 16)

    params = {}
    w = 0.1 * jax.random.normal(keys[0], (feature_maps, channels, 4, 4),
                                jnp.float32)
    params["conv0"] = spectral_normalize(w, keys[1])

    size_mult = 1
    ki = 2
    for i in range(num_layers - 1):
        new_mult = size_mult * 2
        w = 0.1 * jax.random.normal(
            keys[ki], (feature_maps * new_mult, feature_maps * size_mult, 4, 4),
            jnp.float32)
        ki += 1
        params[f"conv{i + 1}"] = spectral_normalize(w, keys[ki]); ki += 1
        params[f"in{i + 1}_g"] = 1.0 + 0.1 * jax.random.normal(
            keys[ki], (feature_maps * new_mult,), jnp.float32); ki += 1
        params[f"in{i + 1}_b"] = 0.1 * jax.random.normal(
            keys[ki], (feature_maps * new_mult,), jnp.float32); ki += 1
        size_mult = new_mult

    w = 0.1 * jax.random.normal(keys[ki], (1, feature_maps * size_mult, 4, 4),
                                jnp.float32)
    ki += 1
    params["conv_final"] = spectral_normalize(w, keys[ki])

    # Kernel-side weights (matmul layout / bf16 cast) precomputed once.
    kparams = prepare_kernel_params(params, num_layers)

    x = jax.random.normal(keys[15], (B, channels, image_size, image_size),
                          jnp.float32)

    fwd = jax.jit(discriminator_forward)
    out = jax.block_until_ready(fwd(x, kparams))
    assert out.shape == (B, 1, 1, 1), out.shape

    ref = jax.block_until_ready(reference_forward(x, params, num_layers))
    assert jnp.allclose(out, ref, atol=1e-2, rtol=1e-2), (out, ref)

    print("KERNEL_OK")
</pallas_src>

<mosaic_0001>
module attributes {stable_mosaic.version = 11 : i64} {
  func.func @kernel(%arg0: i32, %arg1: memref<1x64x48xbf16, #tpu.memory_space<vmem>>, %arg2: memref<48x16xbf16, #tpu.memory_space<vmem>>, %arg3: memref<256x32xbf16, #tpu.memory_space<vmem>>, %arg4: memref<1x32xf32, #tpu.memory_space<vmem>>, %arg5: memref<1x32xf32, #tpu.memory_space<vmem>>, %arg6: memref<16x32xf32, #tpu.memory_space<vmem>>, %arg7: memref<1x1x1xf32, #tpu.memory_space<vmem>>, %arg8: memref<1x20x5x16xbf16, #tpu.memory_space<vmem>>, %arg9: memref<1x16x256xbf16, #tpu.memory_space<vmem>>) attributes {dimension_semantics = [#tpu.dimension_semantics<parallel>], iteration_bounds = array<i64: 2>, scalar_prefetch = 0 : i64, scratch_operands = 2 : i64, tpu.core_type = #tpu.core_type<tc>, window_params = [{transform_indices = @transform_0, window_bounds = array<i64: 1, 64, 48>}, {pipeline_mode = #tpu.pipeline_mode<synchronous>, transform_indices = @transform_1, window_bounds = array<i64: 48, 16>}, {pipeline_mode = #tpu.pipeline_mode<synchronous>, transform_indices = @transform_2, window_bounds = array<i64: 256, 32>}, {pipeline_mode = #tpu.pipeline_mode<synchronous>, transform_indices = @transform_3, window_bounds = array<i64: 1, 32>}, {pipeline_mode = #tpu.pipeline_mode<synchronous>, transform_indices = @transform_4, window_bounds = array<i64: 1, 32>}, {pipeline_mode = #tpu.pipeline_mode<synchronous>, transform_indices = @transform_5, window_bounds = array<i64: 16, 32>}, {transform_indices = @transform_6, window_bounds = array<i64: 1, 1, 1>}]} {
    %c0 = arith.constant 0 : index
    %c0_0 = arith.constant 0 : index
    %c0_1 = arith.constant 0 : index
    %0 = vector.load %arg1[%c0, %c0_0, %c0_1] : memref<1x64x48xbf16, #tpu.memory_space<vmem>>, vector<1x64x48xbf16>
    %1 = vector.shape_cast %0 : vector<1x64x48xbf16> to vector<64x48xbf16>
    %c0_2 = arith.constant 0 : index
    %c0_3 = arith.constant 0 : index
    %2 = vector.load %arg2[%c0_2, %c0_3] : memref<48x16xbf16, #tpu.memory_space<vmem>>, vector<48x16xbf16>
    %cst = arith.constant dense<0.000000e+00> : vector<64x16xf32>
    %3 = tpu.matmul %1, %2, %cst {dimension_numbers = #tpu.dot_dimension_numbers<[1], [0], [0], [1], [0, 0, 1, 1], [], []>} : vector<64x48xbf16>, vector<48x16xbf16>, vector<64x16xf32> -> vector<64x16xf32>
    %cst_4 = arith.constant 0.000000e+00 : f32
    %4 = vector.broadcast %cst_4 : f32 to vector<64x16xf32>
    %5 = arith.cmpf oge, %3, %4 : vector<64x16xf32>
    %cst_5 = arith.constant 2.000000e-01 : f32
    %6 = vector.broadcast %cst_5 : f32 to vector<64x16xf32>
    %7 = arith.mulf %6, %3 : vector<64x16xf32>
    %8 = arith.select %5, %3, %7 : vector<64x16xi1>, vector<64x16xf32>
    %9 = arith.truncf %8 : vector<64x16xf32> to vector<64x16xbf16>
    %cst_6 = arith.constant 0.000000e+00 : bf16
    %10 = vector.broadcast %cst_6 : bf16 to vector<1x20x5x16xbf16>
    %c0_7 = arith.constant 0 : index
    %c0_8 = arith.constant 0 : index
    %c0_9 = arith.constant 0 : index
    %c0_10 = arith.constant 0 : index
    %11 = vector.load %arg8[%c0_7, %c0_8, %c0_9, %c0_10] : memref<1x20x5x16xbf16, #tpu.memory_space<vmem>>, vector<1x20x5x16xbf16>
    tpu.vector_store %arg8[%c0_7, %c0_8, %c0_9, %c0_10], %10 {strides = array<i32>} : memref<1x20x5x16xbf16, #tpu.memory_space<vmem>>, vector<1x20x5x16xbf16>,
    %12 = vector.extract_strided_slice %9 {offsets = [0, 0], sizes = [4, 16], strides = [1, 1]} : vector<64x16xbf16> to vector<4x16xbf16>
    %c0_11 = arith.constant 0 : index
    %c1 = arith.constant 1 : index
    %c1_12 = arith.constant 1 : index
    %c0_13 = arith.constant 0 : index
    %13 = vector.load %arg8[%c0_11, %c1, %c1_12, %c0_13] : memref<1x20x5x16xbf16, #tpu.memory_space<vmem>>, vector<1x1x4x16xbf16>
    %14 = vector.shape_cast %13 : vector<1x1x4x16xbf16> to vector<4x16xbf16>
    %15 = vector.shape_cast %12 : vector<4x16xbf16> to vector<1x1x4x16xbf16>
    tpu.vector_store %arg8[%c0_11, %c1, %c1_12, %c0_13], %15 {strides = array<i32>} : memref<1x20x5x16xbf16, #tpu.memory_space<vmem>>, vector<1x1x4x16xbf16>,
    %16 = vector.extract_strided_slice %9 {offsets = [4, 0], sizes = [4, 16], strides = [1, 1]} : vector<64x16xbf16> to vector<4x16xbf16>
    %c0_14 = arith.constant 0 : index
    %c2 = arith.constant 2 : index
    %c1_15 = arith.constant 1 : index
    %c0_16 = arith.constant 0 : index
    %17 = vector.load %arg8[%c0_14, %c2, %c1_15, %c0_16] : memref<1x20x5x16xbf16, #tpu.memory_space<vmem>>, vector<1x1x4x16xbf16>
    %18 = vector.shape_cast %17 : vector<1x1x4x16xbf16> to vector<4x16xbf16>
    %19 = vector.shape_cast %16 : vector<4x16xbf16> to vector<1x1x4x16xbf16>
    tpu.vector_store %arg8[%c0_14, %c2, %c1_15, %c0_16], %19 {strides = array<i32>} : memref<1x20x5x16xbf16, #tpu.memory_space<vmem>>, vector<1x1x4x16xbf16>,
    %20 = vector.extract_strided_slice %9 {offsets = [8, 0], sizes = [4, 16], strides = [1, 1]} : vector<64x16xbf16> to vector<4x16xbf16>
    %c0_17 = arith.constant 0 : index
    %c3 = arith.constant 3 : index
    %c1_18 = arith.constant 1 : index
    %c0_19 = arith.constant 0 : index
    %21 = vector.load %arg8[%c0_17, %c3, %c1_18, %c0_19] : memref<1x20x5x16xbf16, #tpu.memory_space<vmem>>, vector<1x1x4x16xbf16>
    %22 = vector.shape_cast %21 : vector<1x1x4x16xbf16> to vector<4x16xbf16>
    %23 = vector.shape_cast %20 : vector<4x16xbf16> to vector<1x1x4x16xbf16>
    tpu.vector_store %arg8[%c0_17, %c3, %c1_18, %c0_19], %23 {strides = array<i32>} : memref<1x20x5x16xbf16, #tpu.memory_space<vmem>>, vector<1x1x4x16xbf16>,
    %24 = vector.extract_strided_slice %9 {offsets = [12, 0], sizes = [4, 16], strides = [1, 1]} : vector<64x16xbf16> to vector<4x16xbf16>
    %c0_20 = arith.constant 0 : index
    %c4 = arith.constant 4 : index
    %c1_21 = arith.constant 1 : index
    %c0_22 = arith.constant 0 : index
    %25 = vector.load %arg8[%c0_20, %c4, %c1_21, %c0_22] : memref<1x20x5x16xbf16, #tpu.memory_space<vmem>>, vector<1x1x4x16xbf16>
    %26 = vector.shape_cast %25 : vector<1x1x4x16xbf16> to vector<4x16xbf16>
    %27 = vector.shape_cast %24 : vector<4x16xbf16> to vector<1x1x4x16xbf16>
    tpu.vector_store %arg8[%c0_20, %c4, %c1_21, %c0_22], %27 {strides = array<i32>} : memref<1x20x5x16xbf16, #tpu.memory_space<vmem>>, vector<1x1x4x16xbf16>,
    %28 = vector.extract_strided_slice %9 {offsets = [16, 0], sizes = [4, 16], strides = [1, 1]} : vector<64x16xbf16> to vector<4x16xbf16>
    %c0_23 = arith.constant 0 : index
    %c6 = arith.constant 6 : index
    %c0_24 = arith.constant 0 : index
    %c0_25 = arith.constant 0 : index
    %29 = vector.load %arg8[%c0_23, %c6, %c0_24, %c0_25] : memref<1x20x5x16xbf16, #tpu.memory_space<vmem>>, vector<1x1x4x16xbf16>
    %30 = vector.shape_cast %29 : vector<1x1x4x16xbf16> to vector<4x16xbf16>
    %31 = vector.shape_cast %28 : vector<4x16xbf16> to vector<1x1x4x16xbf16>
    tpu.vector_store %arg8[%c0_23, %c6, %c0_24, %c0_25], %31 {strides = array<i32>} : memref<1x20x5x16xbf16, #tpu.memory_space<vmem>>, vector<1x1x4x16xbf16>,
    %32 = vector.extract_strided_slice %9 {offsets = [20, 0], sizes = [4, 16], strides = [1, 1]} : vector<64x16xbf16> to vector<4x16xbf16>
    %c0_26 = arith.constant 0 : index
    %c7 = arith.constant 7 : index
    %c0_27 = arith.constant 0 : index
    %c0_28 = arith.constant 0 : index
    %33 = vector.load %arg8[%c0_26, %c7, %c0_27, %c0_28] : memref<1x20x5x16xbf16, #tpu.memory_space<vmem>>, vector<1x1x4x16xbf16>
    %34 = vector.shape_cast %33 : vector<1x1x4x16xbf16> to vector<4x16xbf16>
    %35 = vector.shape_cast %32 : vector<4x16xbf16> to vector<1x1x4x16xbf16>
    tpu.vector_store %arg8[%c0_26, %c7, %c0_27, %c0_28], %35 {strides = array<i32>} : memref<1x20x5x16xbf16, #tpu.memory_space<vmem>>, vector<1x1x4x16xbf16>,
    %36 = vector.extract_strided_slice %9 {offsets = [24, 0], sizes = [4, 16], strides = [1, 1]} : vector<64x16xbf16> to vector<4x16xbf16>
    %c0_29 = arith.constant 0 : index
    %c8 = arith.constant 8 : index
    %c0_30 = arith.constant 0 : index
    %c0_31 = arith.constant 0 : index
    %37 = vector.load %arg8[%c0_29, %c8, %c0_30, %c0_31] : memref<1x20x5x16xbf16, #tpu.memory_space<vmem>>, vector<1x1x4x16xbf16>
    %38 = vector.shape_cast %37 : vector<1x1x4x16xbf16> to vector<4x16xbf16>
    %39 = vector.shape_cast %36 : vector<4x16xbf16> to vector<1x1x4x16xbf16>
    tpu.vector_store %arg8[%c0_29, %c8, %c0_30, %c0_31], %39 {strides = array<i32>} : memref<1x20x5x16xbf16, #tpu.memory_space<vmem>>, vector<1x1x4x16xbf16>,
    %40 = vector.extract_strided_slice %9 {offsets = [28, 0], sizes = [4, 16], strides = [1, 1]} : vector<64x16xbf16> to vector<4x16xbf16>
    %c0_32 = arith.constant 0 : index
    %c9 = arith.constant 9 : index
    %c0_33 = arith.constant 0 : index
    %c0_34 = arith.constant 0 : index
    %41 = vector.load %arg8[%c0_32, %c9, %c0_33, %c0_34] : memref<1x20x5x16xbf16, #tpu.memory_space<vmem>>, vector<1x1x4x16xbf16>
    %42 = vector.shape_cast %41 : vector<1x1x4x16xbf16> to vector<4x16xbf16>
    %43 = vector.shape_cast %40 : vector<4x16xbf16> to vector<1x1x4x16xbf16>
    tpu.vector_store %arg8[%c0_32, %c9, %c0_33, %c0_34], %43 {strides = array<i32>} : memref<1x20x5x16xbf16, #tpu.memory_space<vmem>>, vector<1x1x4x16xbf16>,
    %44 = vector.extract_strided_slice %9 {offsets = [32, 0], sizes = [4, 16], strides = [1, 1]} : vector<64x16xbf16> to vector<4x16xbf16>
    %c0_35 = arith.constant 0 : index
    %c10 = arith.constant 10 : index
    %c1_36 = arith.constant 1 : index
    %c0_37 = arith.constant 0 : index
    %45 = vector.load %arg8[%c0_35, %c10, %c1_36, %c0_37] : memref<1x20x5x16xbf16, #tpu.memory_space<vmem>>, vector<1x1x4x16xbf16>
    %46 = vector.shape_cast %45 : vector<1x1x4x16xbf16> to vector<4x16xbf16>
    %47 = vector.shape_cast %44 : vector<4x16xbf16> to vector<1x1x4x16xbf16>
    tpu.vector_store %arg8[%c0_35, %c10, %c1_36, %c0_37], %47 {strides = array<i32>} : memref<1x20x5x16xbf16, #tpu.memory_space<vmem>>, vector<1x1x4x16xbf16>,
    %48 = vector.extract_strided_slice %9 {offsets = [36, 0], sizes = [4, 16], strides = [1, 1]} : vector<64x16xbf16> to vector<4x16xbf16>
    %c0_38 = arith.constant 0 : index
    %c11 = arith.constant 11 : index
    %c1_39 = arith.constant 1 : index
    %c0_40 = arith.constant 0 : index
    %49 = vector.load %arg8[%c0_38, %c11, %c1_39, %c0_40] : memref<1x20x5x16xbf16, #tpu.memory_space<vmem>>, vector<1x1x4x16xbf16>
    %50 = vector.shape_cast %49 : vector<1x1x4x16xbf16> to vector<4x16xbf16>
    %51 = vector.shape_cast %48 : vector<4x16xbf16> to vector<1x1x4x16xbf16>
    tpu.vector_store %arg8[%c0_38, %c11, %c1_39, %c0_40], %51 {strides = array<i32>} : memref<1x20x5x16xbf16, #tpu.memory_space<vmem>>, vector<1x1x4x16xbf16>,
    %52 = vector.extract_strided_slice %9 {offsets = [40, 0], sizes = [4, 16], strides = [1, 1]} : vector<64x16xbf16> to vector<4x16xbf16>
    %c0_41 = arith.constant 0 : index
    %c12 = arith.constant 12 : index
    %c1_42 = arith.constant 1 : index
    %c0_43 = arith.constant 0 : index
    %53 = vector.load %arg8[%c0_41, %c12, %c1_42, %c0_43] : memref<1x20x5x16xbf16, #tpu.memory_space<vmem>>, vector<1x1x4x16xbf16>
    %54 = vector.shape_cast %53 : vector<1x1x4x16xbf16> to vector<4x16xbf16>
    %55 = vector.shape_cast %52 : vector<4x16xbf16> to vector<1x1x4x16xbf16>
    tpu.vector_store %arg8[%c0_41, %c12, %c1_42, %c0_43], %55 {strides = array<i32>} : memref<1x20x5x16xbf16, #tpu.memory_space<vmem>>, vector<1x1x4x16xbf16>,
    %56 = vector.extract_strided_slice %9 {offsets = [44, 0], sizes = [4, 16], strides = [1, 1]} : vector<64x16xbf16> to vector<4x16xbf16>
    %c0_44 = arith.constant 0 : index
    %c13 = arith.constant 13 : index
    %c1_45 = arith.constant 1 : index
    %c0_46 = arith.constant 0 : index
    %57 = vector.load %arg8[%c0_44, %c13, %c1_45, %c0_46] : memref<1x20x5x16xbf16, #tpu.memory_space<vmem>>, vector<1x1x4x16xbf16>
    %58 = vector.shape_cast %57 : vector<1x1x4x16xbf16> to vector<4x16xbf16>
    %59 = vector.shape_cast %56 : vector<4x16xbf16> to vector<1x1x4x16xbf16>
    tpu.vector_store %arg8[%c0_44, %c13, %c1_45, %c0_46], %59 {strides = array<i32>} : memref<1x20x5x16xbf16, #tpu.memory_space<vmem>>, vector<1x1x4x16xbf16>,
    %60 = vector.extract_strided_slice %9 {offsets = [48, 0], sizes = [4, 16], strides = [1, 1]} : vector<64x16xbf16> to vector<4x16xbf16>
    %c0_47 = arith.constant 0 : index
    %c15 = arith.constant 15 : index
    %c0_48 = arith.constant 0 : index
    %c0_49 = arith.constant 0 : index
    %61 = vector.load %arg8[%c0_47, %c15, %c0_48, %c0_49] : memref<1x20x5x16xbf16, #tpu.memory_space<vmem>>, vector<1x1x4x16xbf16>
    %62 = vector.shape_cast %61 : vector<1x1x4x16xbf16> to vector<4x16xbf16>
    %63 = vector.shape_cast %60 : vector<4x16xbf16> to vector<1x1x4x16xbf16>
    tpu.vector_store %arg8[%c0_47, %c15, %c0_48, %c0_49], %63 {strides = array<i32>} : memref<1x20x5x16xbf16, #tpu.memory_space<vmem>>, vector<1x1x4x16xbf16>,
    %64 = vector.extract_strided_slice %9 {offsets = [52, 0], sizes = [4, 16], strides = [1, 1]} : vector<64x16xbf16> to vector<4x16xbf16>
    %c0_50 = arith.constant 0 : index
    %c16 = arith.constant 16 : index
    %c0_51 = arith.constant 0 : index
    %c0_52 = arith.constant 0 : index
    %65 = vector.load %arg8[%c0_50, %c16, %c0_51, %c0_52] : memref<1x20x5x16xbf16, #tpu.memory_space<vmem>>, vector<1x1x4x16xbf16>
    %66 = vector.shape_cast %65 : vector<1x1x4x16xbf16> to vector<4x16xbf16>
    %67 = vector.shape_cast %64 : vector<4x16xbf16> to vector<1x1x4x16xbf16>
    tpu.vector_store %arg8[%c0_50, %c16, %c0_51, %c0_52], %67 {strides = array<i32>} : memref<1x20x5x16xbf16, #tpu.memory_space<vmem>>, vector<1x1x4x16xbf16>,
    %68 = vector.extract_strided_slice %9 {offsets = [56, 0], sizes = [4, 16], strides = [1, 1]} : vector<64x16xbf16> to vector<4x16xbf16>
    %c0_53 = arith.constant 0 : index
    %c17 = arith.constant 17 : index
    %c0_54 = arith.constant 0 : index
    %c0_55 = arith.constant 0 : index
    %69 = vector.load %arg8[%c0_53, %c17, %c0_54, %c0_55] : memref<1x20x5x16xbf16, #tpu.memory_space<vmem>>, vector<1x1x4x16xbf16>
    %70 = vector.shape_cast %69 : vector<1x1x4x16xbf16> to vector<4x16xbf16>
    %71 = vector.shape_cast %68 : vector<4x16xbf16> to vector<1x1x4x16xbf16>
    tpu.vector_store %arg8[%c0_53, %c17, %c0_54, %c0_55], %71 {strides = array<i32>} : memref<1x20x5x16xbf16, #tpu.memory_space<vmem>>, vector<1x1x4x16xbf16>,
    %72 = vector.extract_strided_slice %9 {offsets = [60, 0], sizes = [4, 16], strides = [1, 1]} : vector<64x16xbf16> to vector<4x16xbf16>
    %c0_56 = arith.constant 0 : index
    %c18 = arith.constant 18 : index
    %c0_57 = arith.constant 0 : index
    %c0_58 = arith.constant 0 : index
    %73 = vector.load %arg8[%c0_56, %c18, %c0_57, %c0_58] : memref<1x20x5x16xbf16, #tpu.memory_space<vmem>>, vector<1x1x4x16xbf16>
    %74 = vector.shape_cast %73 : vector<1x1x4x16xbf16> to vector<4x16xbf16>
    %75 = vector.shape_cast %72 : vector<4x16xbf16> to vector<1x1x4x16xbf16>
    tpu.vector_store %arg8[%c0_56, %c18, %c0_57, %c0_58], %75 {strides = array<i32>} : memref<1x20x5x16xbf16, #tpu.memory_space<vmem>>, vector<1x1x4x16xbf16>,
    %c0_59 = arith.constant 0 : index
    %c0_60 = arith.constant 0 : index
    %c0_61 = arith.constant 0 : index
    %c0_62 = arith.constant 0 : index
    %76 = vector.load %arg8[%c0_59, %c0_60, %c0_61, %c0_62] : memref<1x20x5x16xbf16, #tpu.memory_space<vmem>>, vector<1x4x4x16xbf16>
    %77 = vector.shape_cast %76 : vector<1x4x4x16xbf16> to vector<4x4x16xbf16>
    %78 = vector.extract_strided_slice %77 {offsets = [0, 0, 0], sizes = [1, 4, 16], strides = [1, 1, 1]} : vector<4x4x16xbf16> to vector<1x4x16xbf16>
    %79 = vector.shape_cast %78 : vector<1x4x16xbf16> to vector<4x16xbf16>
    %c0_63 = arith.constant 0 : index
    %c0_64 = arith.constant 0 : index
    %c0_65 = arith.constant 0 : index
    %80 = vector.load %arg9[%c0_63, %c0_64, %c0_65] : memref<1x16x256xbf16, #tpu.memory_space<vmem>>, vector<1x4x16xbf16>
    %81 = vector.shape_cast %80 : vector<1x4x16xbf16> to vector<4x16xbf16>
    %82 = vector.shape_cast %79 : vector<4x16xbf16> to vector<1x4x16xbf16>
    tpu.vector_store %arg9[%c0_63, %c0_64, %c0_65], %82 {strides = array<i32>} : memref<1x16x256xbf16, #tpu.memory_space<vmem>>, vector<1x4x16xbf16>,
    %83 = vector.extract_strided_slice %77 {offsets = [1, 0, 0], sizes = [1, 4, 16], strides = [1, 1, 1]} : vector<4x4x16xbf16> to vector<1x4x16xbf16>
    %84 = vector.shape_cast %83 : vector<1x4x16xbf16> to vector<4x16xbf16>
    %c0_66 = arith.constant 0 : index
    %c4_67 = arith.constant 4 : index
    %c0_68 = arith.constant 0 : index
    %85 = vector.load %arg9[%c0_66, %c4_67, %c0_68] : memref<1x16x256xbf16, #tpu.memory_space<vmem>>, vector<1x4x16xbf16>
    %86 = vector.shape_cast %85 : vector<1x4x16xbf16> to vector<4x16xbf16>
    %87 = vector.shape_cast %84 : vector<4x16xbf16> to vector<1x4x16xbf16>
    tpu.vector_store %arg9[%c0_66, %c4_67, %c0_68], %87 {strides = array<i32>} : memref<1x16x256xbf16, #tpu.memory_space<vmem>>, vector<1x4x16xbf16>,
    %88 = vector.extract_strided_slice %77 {offsets = [2, 0, 0], sizes = [1, 4, 16], strides = [1, 1, 1]} : vector<4x4x16xbf16> to vector<1x4x16xbf16>
    %89 = vector.shape_cast %88 : vector<1x4x16xbf16> to vector<4x16xbf16>
    %c0_69 = arith.constant 0 : index
    %c8_70 = arith.constant 8 : index
    %c0_71 = arith.constant 0 : index
    %90 = vector.load %arg9[%c0_69, %c8_70, %c0_71] : memref<1x16x256xbf16, #tpu.memory_space<vmem>>, vector<1x4x16xbf16>
    %91 = vector.shape_cast %90 : vector<1x4x16xbf16> to vector<4x16xbf16>
    %92 = vector.shape_cast %89 : vector<4x16xbf16> to vector<1x4x16xbf16>
    tpu.vector_store %arg9[%c0_69, %c8_70, %c0_71], %92 {strides = array<i32>} : memref<1x16x256xbf16, #tpu.memory_space<vmem>>, vector<1x4x16xbf16>,
    %93 = vector.extract_strided_slice %77 {offsets = [3, 0, 0], sizes = [1, 4, 16], strides = [1, 1, 1]} : vector<4x4x16xbf16> to vector<1x4x16xbf16>
    %94 = vector.shape_cast %93 : vector<1x4x16xbf16> to vector<4x16xbf16>
    %c0_72 = arith.constant 0 : index
    %c12_73 = arith.constant 12 : index
    %c0_74 = arith.constant 0 : index
    %95 = vector.load %arg9[%c0_72, %c12_73, %c0_74] : memref<1x16x256xbf16, #tpu.memory_space<vmem>>, vector<1x4x16xbf16>
    %96 = vector.shape_cast %95 : vector<1x4x16xbf16> to vector<4x16xbf16>
    %97 = vector.shape_cast %94 : vector<4x16xbf16> to vector<1x4x16xbf16>
    tpu.vector_store %arg9[%c0_72, %c12_73, %c0_74], %97 {strides = array<i32>} : memref<1x16x256xbf16, #tpu.memory_space<vmem>>, vector<1x4x16xbf16>,
    %c0_75 = arith.constant 0 : index
    %c5 = arith.constant 5 : index
    %c0_76 = arith.constant 0 : index
    %c0_77 = arith.constant 0 : index
    %98 = vector.load %arg8[%c0_75, %c5, %c0_76, %c0_77] : memref<1x20x5x16xbf16, #tpu.memory_space<vmem>>, vector<1x4x4x16xbf16>
    %99 = vector.shape_cast %98 : vector<1x4x4x16xbf16> to vector<4x4x16xbf16>
    %100 = vector.extract_strided_slice %99 {offsets = [0, 0, 0], sizes = [1, 4, 16], strides = [1, 1, 1]} : vector<4x4x16xbf16> to vector<1x4x16xbf16>
    %101 = vector.shape_cast %100 : vector<1x4x16xbf16> to vector<4x16xbf16>
    %c0_78 = arith.constant 0 : index
    %c0_79 = arith.constant 0 : index
    %c16_80 = arith.constant 16 : index
    %102 = vector.load %arg9[%c0_78, %c0_79, %c16_80] : memref<1x16x256xbf16, #tpu.memory_space<vmem>>, vector<1x4x16xbf16>
    %103 = vector.shape_cast %102 : vector<1x4x16xbf16> to vector<4x16xbf16>
    %104 = vector.shape_cast %101 : vector<4x16xbf16> to vector<1x4x16xbf16>
    tpu.vector_store %arg9[%c0_78, %c0_79, %c16_80], %104 {strides = array<i32>} : memref<1x16x256xbf16, #tpu.memory_space<vmem>>, vector<1x4x16xbf16>,
    %105 = vector.extract_strided_slice %99 {offsets = [1, 0, 0], sizes = [1, 4, 16], strides = [1, 1, 1]} : vector<4x4x16xbf16> to vector<1x4x16xbf16>
    %106 = vector.shape_cast %105 : vector<1x4x16xbf16> to vector<4x16xbf16>
    %c0_81 = arith.constant 0 : index
    %c4_82 = arith.constant 4 : index
    %c16_83 = arith.constant 16 : index
    %107 = vector.load %arg9[%c0_81, %c4_82, %c16_83] : memref<1x16x256xbf16, #tpu.memory_space<vmem>>, vector<1x4x16xbf16>
    %108 = vector.shape_cast %107 : vector<1x4x16xbf16> to vector<4x16xbf16>
    %109 = vector.shape_cast %106 : vector<4x16xbf16> to vector<1x4x16xbf16>
    tpu.vector_store %arg9[%c0_81, %c4_82, %c16_83], %109 {strides = array<i32>} : memref<1x16x256xbf16, #tpu.memory_space<vmem>>, vector<1x4x16xbf16>,
    %110 = vector.extract_strided_slice %99 {offsets = [2, 0, 0], sizes = [1, 4, 16], strides = [1, 1, 1]} : vector<4x4x16xbf16> to vector<1x4x16xbf16>
    %111 = vector.shape_cast %110 : vector<1x4x16xbf16> to vector<4x16xbf16>
    %c0_84 = arith.constant 0 : index
    %c8_85 = arith.constant 8 : index
    %c16_86 = arith.constant 16 : index
    %112 = vector.load %arg9[%c0_84, %c8_85, %c16_86] : memref<1x16x256xbf16, #tpu.memory_space<vmem>>, vector<1x4x16xbf16>
    %113 = vector.shape_cast %112 : vector<1x4x16xbf16> to vector<4x16xbf16>
    %114 = vector.shape_cast %111 : vector<4x16xbf16> to vector<1x4x16xbf16>
    tpu.vector_store %arg9[%c0_84, %c8_85, %c16_86], %114 {strides = array<i32>} : memref<1x16x256xbf16, #tpu.memory_space<vmem>>, vector<1x4x16xbf16>,
    %115 = vector.extract_strided_slice %99 {offsets = [3, 0, 0], sizes = [1, 4, 16], strides = [1, 1, 1]} : vector<4x4x16xbf16> to vector<1x4x16xbf16>
    %116 = vector.shape_cast %115 : vector<1x4x16xbf16> to vector<4x16xbf16>
    %c0_87 = arith.constant 0 : index
    %c12_88 = arith.constant 12 : index
    %c16_89 = arith.constant 16 : index
    %117 = vector.load %arg9[%c0_87, %c12_88, %c16_89] : memref<1x16x256xbf16, #tpu.memory_space<vmem>>, vector<1x4x16xbf16>
    %118 = vector.shape_cast %117 : vector<1x4x16xbf16> to vector<4x16xbf16>
    %119 = vector.shape_cast %116 : vector<4x16xbf16> to vector<1x4x16xbf16>
    tpu.vector_store %arg9[%c0_87, %c12_88, %c16_89], %119 {strides = array<i32>} : memref<1x16x256xbf16, #tpu.memory_space<vmem>>, vector<1x4x16xbf16>,
    %c0_90 = arith.constant 0 : index
    %c0_91 = arith.constant 0 : index
    %c1_92 = arith.constant 1 : index
    %c0_93 = arith.constant 0 : index
    %120 = vector.load %arg8[%c0_90, %c0_91, %c1_92, %c0_93] : memref<1x20x5x16xbf16, #tpu.memory_space<vmem>>, vector<1x4x4x16xbf16>
    %121 = vector.shape_cast %120 : vector<1x4x4x16xbf16> to vector<4x4x16xbf16>
    %122 = vector.extract_strided_slice %121 {offsets = [0, 0, 0], sizes = [1, 4, 16], strides = [1, 1, 1]} : vector<4x4x16xbf16> to vector<1x4x16xbf16>
    %123 = vector.shape_cast %122 : vector<1x4x16xbf16> to vector<4x16xbf16>
    %c0_94 = arith.constant 0 : index
    %c0_95 = arith.constant 0 : index
    %c32 = arith.constant 32 : index
    %124 = vector.load %arg9[%c0_94, %c0_95, %c32] : memref<1x16x256xbf16, #tpu.memory_space<vmem>>, vector<1x4x16xbf16>
    %125 = vector.shape_cast %124 : vector<1x4x16xbf16> to vector<4x16xbf16>
    %126 = vector.shape_cast %123 : vector<4x16xbf16> to vector<1x4x16xbf16>
    tpu.vector_store %arg9[%c0_94, %c0_95, %c32], %126 {strides = array<i32>} : memref<1x16x256xbf16, #tpu.memory_space<vmem>>, vector<1x4x16xbf16>,
    %127 = vector.extract_strided_slice %121 {offsets = [1, 0, 0], sizes = [1, 4, 16], strides = [1, 1, 1]} : vector<4x4x16xbf16> to vector<1x4x16xbf16>
    %128 = vector.shape_cast %127 : vector<1x4x16xbf16> to vector<4x16xbf16>
    %c0_96 = arith.constant 0 : index
    %c4_97 = arith.constant 4 : index
    %c32_98 = arith.constant 32 : index
    %129 = vector.load %arg9[%c0_96, %c4_97, %c32_98] : memref<1x16x256xbf16, #tpu.memory_space<vmem>>, vector<1x4x16xbf16>
    %130 = vector.shape_cast %129 : vector<1x4x16xbf16> to vector<4x16xbf16>
    %131 = vector.shape_cast %128 : vector<4x16xbf16> to vector<1x4x16xbf16>
    tpu.vector_store %arg9[%c0_96, %c4_97, %c32_98], %131 {strides = array<i32>} : memref<1x16x256xbf16, #tpu.memory_space<vmem>>, vector<1x4x16xbf16>,
    %132 = vector.extract_strided_slice %121 {offsets = [2, 0, 0], sizes = [1, 4, 16], strides = [1, 1, 1]} : vector<4x4x16xbf16> to vector<1x4x16xbf16>
    %133 = vector.shape_cast %132 : vector<1x4x16xbf16> to vector<4x16xbf16>
    %c0_99 = arith.constant 0 : index
    %c8_100 = arith.constant 8 : index
    %c32_101 = arith.constant 32 : index
    %134 = vector.load %arg9[%c0_99, %c8_100, %c32_101] : memref<1x16x256xbf16, #tpu.memory_space<vmem>>, vector<1x4x16xbf16>
    %135 = vector.shape_cast %134 : vector<1x4x16xbf16> to vector<4x16xbf16>
    %136 = vector.shape_cast %133 : vector<4x16xbf16> to vector<1x4x16xbf16>
    tpu.vector_store %arg9[%c0_99, %c8_100, %c32_101], %136 {strides = array<i32>} : memref<1x16x256xbf16, #tpu.memory_space<vmem>>, vector<1x4x16xbf16>,
    %137 = vector.extract_strided_slice %121 {offsets = [3, 0, 0], sizes = [1, 4, 16], strides = [1, 1, 1]} : vector<4x4x16xbf16> to vector<1x4x16xbf16>
    %138 = vector.shape_cast %137 : vector<1x4x16xbf16> to vector<4x16xbf16>
    %c0_102 = arith.constant 0 : index
    %c12_103 = arith.constant 12 : index
    %c32_104 = arith.constant 32 : index
    %139 = vector.load %arg9[%c0_102, %c12_103, %c32_104] : memref<1x16x256xbf16, #tpu.memory_space<vmem>>, vector<1x4x16xbf16>
    %140 = vector.shape_cast %139 : vector<1x4x16xbf16> to vector<4x16xbf16>
    %141 = vector.shape_cast %138 : vector<4x16xbf16> to vector<1x4x16xbf16>
    tpu.vector_store %arg9[%c0_102, %c12_103, %c32_104], %141 {strides = array<i32>} : memref<1x16x256xbf16, #tpu.memory_space<vmem>>, vector<1x4x16xbf16>,
    %c0_105 = arith.constant 0 : index
    %c5_106 = arith.constant 5 : index
    %c1_107 = arith.constant 1 : index
    %c0_108 = arith.constant 0 : index
    %142 = vector.load %arg8[%c0_105, %c5_106, %c1_107, %c0_108] : memref<1x20x5x16xbf16, #tpu.memory_space<vmem>>, vector<1x4x4x16xbf16>
    %143 = vector.shape_cast %142 : vector<1x4x4x16xbf16> to vector<4x4x16xbf16>
    %144 = vector.extract_strided_slice %143 {offsets = [0, 0, 0], sizes = [1, 4, 16], strides = [1, 1, 1]} : vector<4x4x16xbf16> to vector<1x4x16xbf16>
    %145 = vector.shape_cast %144 : vector<1x4x16xbf16> to vector<4x16xbf16>
    %c0_109 = arith.constant 0 : index
    %c0_110 = arith.constant 0 : index
    %c48 = arith.constant 48 : index
    %146 = vector.load %arg9[%c0_109, %c0_110, %c48] : memref<1x16x256xbf16, #tpu.memory_space<vmem>>, vector<1x4x16xbf16>
    %147 = vector.shape_cast %146 : vector<1x4x16xbf16> to vector<4x16xbf16>
    %148 = vector.shape_cast %145 : vector<4x16xbf16> to vector<1x4x16xbf16>
    tpu.vector_store %arg9[%c0_109, %c0_110, %c48], %148 {strides = array<i32>} : memref<1x16x256xbf16, #tpu.memory_space<vmem>>, vector<1x4x16xbf16>,
    %149 = vector.extract_strided_slice %143 {offsets = [1, 0, 0], sizes = [1, 4, 16], strides = [1, 1, 1]} : vector<4x4x16xbf16> to vector<1x4x16xbf16>
    %150 = vector.shape_cast %149 : vector<1x4x16xbf16> to vector<4x16xbf16>
    %c0_111 = arith.constant 0 : index
    %c4_112 = arith.constant 4 : index
    %c48_113 = arith.constant 48 : index
    %151 = vector.load %arg9[%c0_111, %c4_112, %c48_113] : memref<1x16x256xbf16, #tpu.memory_space<vmem>>, vector<1x4x16xbf16>
    %152 = vector.shape_cast %151 : vector<1x4x16xbf16> to vector<4x16xbf16>
    %153 = vector.shape_cast %150 : vector<4x16xbf16> to vector<1x4x16xbf16>
    tpu.vector_store %arg9[%c0_111, %c4_112, %c48_113], %153 {strides = array<i32>} : memref<1x16x256xbf16, #tpu.memory_space<vmem>>, vector<1x4x16xbf16>,
    %154 = vector.extract_strided_slice %143 {offsets = [2, 0, 0], sizes = [1, 4, 16], strides = [1, 1, 1]} : vector<4x4x16xbf16> to vector<1x4x16xbf16>
    %155 = vector.shape_cast %154 : vector<1x4x16xbf16> to vector<4x16xbf16>
    %c0_114 = arith.constant 0 : index
    %c8_115 = arith.constant 8 : index
    %c48_116 = arith.constant 48 : index
    %156 = vector.load %arg9[%c0_114, %c8_115, %c48_116] : memref<1x16x256xbf16, #tpu.memory_space<vmem>>, vector<1x4x16xbf16>
    %157 = vector.shape_cast %156 : vector<1x4x16xbf16> to vector<4x16xbf16>
    %158 = vector.shape_cast %155 : vector<4x16xbf16> to vector<1x4x16xbf16>
    tpu.vector_store %arg9[%c0_114, %c8_115, %c48_116], %158 {strides = array<i32>} : memref<1x16x256xbf16, #tpu.memory_space<vmem>>, vector<1x4x16xbf16>,
    %159 = vector.extract_strided_slice %143 {offsets = [3, 0, 0], sizes = [1, 4, 16], strides = [1, 1, 1]} : vector<4x4x16xbf16> to vector<1x4x16xbf16>
    %160 = vector.shape_cast %159 : vector<1x4x16xbf16> to vector<4x16xbf16>
    %c0_117 = arith.constant 0 : index
    %c12_118 = arith.constant 12 : index
    %c48_119 = arith.constant 48 : index
    %161 = vector.load %arg9[%c0_117, %c12_118, %c48_119] : memref<1x16x256xbf16, #tpu.memory_space<vmem>>, vector<1x4x16xbf16>
    %162 = vector.shape_cast %161 : vector<1x4x16xbf16> to vector<4x16xbf16>
    %163 = vector.shape_cast %160 : vector<4x16xbf16> to vector<1x4x16xbf16>
    tpu.vector_store %arg9[%c0_117, %c12_118, %c48_119], %163 {strides = array<i32>} : memref<1x16x256xbf16, #tpu.memory_space<vmem>>, vector<1x4x16xbf16>,
    %c0_120 = arith.constant 0 : index
    %c10_121 = arith.constant 10 : index
    %c0_122 = arith.constant 0 : index
    %c0_123 = arith.constant 0 : index
    %164 = vector.load %arg8[%c0_120, %c10_121, %c0_122, %c0_123] : memref<1x20x5x16xbf16, #tpu.memory_space<vmem>>, vector<1x4x4x16xbf16>
    %165 = vector.shape_cast %164 : vector<1x4x4x16xbf16> to vector<4x4x16xbf16>
    %166 = vector.extract_strided_slice %165 {offsets = [0, 0, 0], sizes = [1, 4, 16], strides = [1, 1, 1]} : vector<4x4x16xbf16> to vector<1x4x16xbf16>
    %167 = vector.shape_cast %166 : vector<1x4x16xbf16> to vector<4x16xbf16>
    %c0_124 = arith.constant 0 : index
    %c0_125 = arith.constant 0 : index
    %c64 = arith.constant 64 : index
    %168 = vector.load %arg9[%c0_124, %c0_125, %c64] : memref<1x16x256xbf16, #tpu.memory_space<vmem>>, vector<1x4x16xbf16>
    %169 = vector.shape_cast %168 : vector<1x4x16xbf16> to vector<4x16xbf16>
    %170 = vector.shape_cast %167 : vector<4x16xbf16> to vector<1x4x16xbf16>
    tpu.vector_store %arg9[%c0_124, %c0_125, %c64], %170 {strides = array<i32>} : memref<1x16x256xbf16, #tpu.memory_space<vmem>>, vector<1x4x16xbf16>,
    %171 = vector.extract_strided_slice %165 {offsets = [1, 0, 0], sizes = [1, 4, 16], strides = [1, 1, 1]} : vector<4x4x16xbf16> to vector<1x4x16xbf16>
    %172 = vector.shape_cast %171 : vector<1x4x16xbf16> to vector<4x16xbf16>
    %c0_126 = arith.constant 0 : index
    %c4_127 = arith.constant 4 : index
    %c64_128 = arith.constant 64 : index
    %173 = vector.load %arg9[%c0_126, %c4_127, %c64_128] : memref<1x16x256xbf16, #tpu.memory_space<vmem>>, vector<1x4x16xbf16>
    %174 = vector.shape_cast %173 : vector<1x4x16xbf16> to vector<4x16xbf16>
    %175 = vector.shape_cast %172 : vector<4x16xbf16> to vector<1x4x16xbf16>
    tpu.vector_store %arg9[%c0_126, %c4_127, %c64_128], %175 {strides = array<i32>} : memref<1x16x256xbf16, #tpu.memory_space<vmem>>, vector<1x4x16xbf16>,
    %176 = vector.extract_strided_slice %165 {offsets = [2, 0, 0], sizes = [1, 4, 16], strides = [1, 1, 1]} : vector<4x4x16xbf16> to vector<1x4x16xbf16>
    %177 = vector.shape_cast %176 : vector<1x4x16xbf16> to vector<4x16xbf16>
    %c0_129 = arith.constant 0 : index
    %c8_130 = arith.constant 8 : index
    %c64_131 = arith.constant 64 : index
    %178 = vector.load %arg9[%c0_129, %c8_130, %c64_131] : memref<1x16x256xbf16, #tpu.memory_space<vmem>>, vector<1x4x16xbf16>
    %179 = vector.shape_cast %178 : vector<1x4x16xbf16> to vector<4x16xbf16>
    %180 = vector.shape_cast %177 : vector<4x16xbf16> to vector<1x4x16xbf16>
    tpu.vector_store %arg9[%c0_129, %c8_130, %c64_131], %180 {strides = array<i32>} : memref<1x16x256xbf16, #tpu.memory_space<vmem>>, vector<1x4x16xbf16>,
    %181 = vector.extract_strided_slice %165 {offsets = [3, 0, 0], sizes = [1, 4, 16], strides = [1, 1, 1]} : vector<4x4x16xbf16> to vector<1x4x16xbf16>
    %182 = vector.shape_cast %181 : vector<1x4x16xbf16> to vector<4x16xbf16>
    %c0_132 = arith.constant 0 : index
    %c12_133 = arith.constant 12 : index
    %c64_134 = arith.constant 64 : index
    %183 = vector.load %arg9[%c0_132, %c12_133, %c64_134] : memref<1x16x256xbf16, #tpu.memory_space<vmem>>, vector<1x4x16xbf16>
    %184 = vector.shape_cast %183 : vector<1x4x16xbf16> to vector<4x16xbf16>
    %185 = vector.shape_cast %182 : vector<4x16xbf16> to vector<1x4x16xbf16>
    tpu.vector_store %arg9[%c0_132, %c12_133, %c64_134], %185 {strides = array<i32>} : memref<1x16x256xbf16, #tpu.memory_space<vmem>>, vector<1x4x16xbf16>,
    %c0_135 = arith.constant 0 : index
    %c15_136 = arith.constant 15 : index
    %c0_137 = arith.constant 0 : index
    %c0_138 = arith.constant 0 : index
    %186 = vector.load %arg8[%c0_135, %c15_136, %c0_137, %c0_138] : memref<1x20x5x16xbf16, #tpu.memory_space<vmem>>, vector<1x4x4x16xbf16>
    %187 = vector.shape_cast %186 : vector<1x4x4x16xbf16> to vector<4x4x16xbf16>
    %188 = vector.extract_strided_slice %187 {offsets = [0, 0, 0], sizes = [1, 4, 16], strides = [1, 1, 1]} : vector<4x4x16xbf16> to vector<1x4x16xbf16>
    %189 = vector.shape_cast %188 : vector<1x4x16xbf16> to vector<4x16xbf16>
    %c0_139 = arith.constant 0 : index
    %c0_140 = arith.constant 0 : index
    %c80 = arith.constant 80 : index
    %190 = vector.load %arg9[%c0_139, %c0_140, %c80] : memref<1x16x256xbf16, #tpu.memory_space<vmem>>, vector<1x4x16xbf16>
    %191 = vector.shape_cast %190 : vector<1x4x16xbf16> to vector<4x16xbf16>
    %192 = vector.shape_cast %189 : vector<4x16xbf16> to vector<1x4x16xbf16>
    tpu.vector_store %arg9[%c0_139, %c0_140, %c80], %192 {strides = array<i32>} : memref<1x16x256xbf16, #tpu.memory_space<vmem>>, vector<1x4x16xbf16>,
    %193 = vector.extract_strided_slice %187 {offsets = [1, 0, 0], sizes = [1, 4, 16], strides = [1, 1, 1]} : vector<4x4x16xbf16> to vector<1x4x16xbf16>
    %194 = vector.shape_cast %193 : vector<1x4x16xbf16> to vector<4x16xbf16>
    %c0_141 = arith.constant 0 : index
    %c4_142 = arith.constant 4 : index
    %c80_143 = arith.constant 80 : index
    %195 = vector.load %arg9[%c0_141, %c4_142, %c80_143] : memref<1x16x256xbf16, #tpu.memory_space<vmem>>, vector<1x4x16xbf16>
    %196 = vector.shape_cast %195 : vector<1x4x16xbf16> to vector<4x16xbf16>
    %197 = vector.shape_cast %194 : vector<4x16xbf16> to vector<1x4x16xbf16>
    tpu.vector_store %arg9[%c0_141, %c4_142, %c80_143], %197 {strides = array<i32>} : memref<1x16x256xbf16, #tpu.memory_space<vmem>>, vector<1x4x16xbf16>,
    %198 = vector.extract_strided_slice %187 {offsets = [2, 0, 0], sizes = [1, 4, 16], strides = [1, 1, 1]} : vector<4x4x16xbf16> to vector<1x4x16xbf16>
    %199 = vector.shape_cast %198 : vector<1x4x16xbf16> to vector<4x16xbf16>
    %c0_144 = arith.constant 0 : index
    %c8_145 = arith.constant 8 : index
    %c80_146 = arith.constant 80 : index
    %200 = vector.load %arg9[%c0_144, %c8_145, %c80_146] : memref<1x16x256xbf16, #tpu.memory_space<vmem>>, vector<1x4x16xbf16>
    %201 = vector.shape_cast %200 : vector<1x4x16xbf16> to vector<4x16xbf16>
    %202 = vector.shape_cast %199 : vector<4x16xbf16> to vector<1x4x16xbf16>
    tpu.vector_store %arg9[%c0_144, %c8_145, %c80_146], %202 {strides = array<i32>} : memref<1x16x256xbf16, #tpu.memory_space<vmem>>, vector<1x4x16xbf16>,
    %203 = vector.extract_strided_slice %187 {offsets = [3, 0, 0], sizes = [1, 4, 16], strides = [1, 1, 1]} : vector<4x4x16xbf16> to vector<1x4x16xbf16>
    %204 = vector.shape_cast %203 : vector<1x4x16xbf16> to vector<4x16xbf16>
    %c0_147 = arith.constant 0 : index
    %c12_148 = arith.constant 12 : index
    %c80_149 = arith.constant 80 : index
    %205 = vector.load %arg9[%c0_147, %c12_148, %c80_149] : memref<1x16x256xbf16, #tpu.memory_space<vmem>>, vector<1x4x16xbf16>
    %206 = vector.shape_cast %205 : vector<1x4x16xbf16> to vector<4x16xbf16>
    %207 = vector.shape_cast %204 : vector<4x16xbf16> to vector<1x4x16xbf16>
    tpu.vector_store %arg9[%c0_147, %c12_148, %c80_149], %207 {strides = array<i32>} : memref<1x16x256xbf16, #tpu.memory_space<vmem>>, vector<1x4x16xbf16>,
    %c0_150 = arith.constant 0 : index
    %c10_151 = arith.constant 10 : index
    %c1_152 = arith.constant 1 : index
    %c0_153 = arith.constant 0 : index
    %208 = vector.load %arg8[%c0_150, %c10_151, %c1_152, %c0_153] : memref<1x20x5x16xbf16, #tpu.memory_space<vmem>>, vector<1x4x4x16xbf16>
    %209 = vector.shape_cast %208 : vector<1x4x4x16xbf16> to vector<4x4x16xbf16>
    %210 = vector.extract_strided_slice %209 {offsets = [0, 0, 0], sizes = [1, 4, 16], strides = [1, 1, 1]} : vector<4x4x16xbf16> to vector<1x4x16xbf16>
    %211 = vector.shape_cast %210 : vector<1x4x16xbf16> to vector<4x16xbf16>
    %c0_154 = arith.constant 0 : index
    %c0_155 = arith.constant 0 : index
    %c96 = arith.constant 96 : index
    %212 = vector.load %arg9[%c0_154, %c0_155, %c96] : memref<1x16x256xbf16, #tpu.memory_space<vmem>>, vector<1x4x16xbf16>
    %213 = vector.shape_cast %212 : vector<1x4x16xbf16> to vector<4x16xbf16>
    %214 = vector.shape_cast %211 : vector<4x16xbf16> to vector<1x4x16xbf16>
    tpu.vector_store %arg9[%c0_154, %c0_155, %c96], %214 {strides = array<i32>} : memref<1x16x256xbf16, #tpu.memory_space<vmem>>, vector<1x4x16xbf16>,
    %215 = vector.extract_strided_slice %209 {offsets = [1, 0, 0], sizes = [1, 4, 16], strides = [1, 1, 1]} : vector<4x4x16xbf16> to vector<1x4x16xbf16>
    %216 = vector.shape_cast %215 : vector<1x4x16xbf16> to vector<4x16xbf16>
    %c0_156 = arith.constant 0 : index
    %c4_157 = arith.constant 4 : index
    %c96_158 = arith.constant 96 : index
    %217 = vector.load %arg9[%c0_156, %c4_157, %c96_158] : memref<1x16x256xbf16, #tpu.memory_space<vmem>>, vector<1x4x16xbf16>
    %218 = vector.shape_cast %217 : vector<1x4x16xbf16> to vector<4x16xbf16>
    %219 = vector.shape_cast %216 : vector<4x16xbf16> to vector<1x4x16xbf16>
    tpu.vector_store %arg9[%c0_156, %c4_157, %c96_158], %219 {strides = array<i32>} : memref<1x16x256xbf16, #tpu.memory_space<vmem>>, vector<1x4x16xbf16>,
    %220 = vector.extract_strided_slice %209 {offsets = [2, 0, 0], sizes = [1, 4, 16], strides = [1, 1, 1]} : vector<4x4x16xbf16> to vector<1x4x16xbf16>
    %221 = vector.shape_cast %220 : vector<1x4x16xbf16> to vector<4x16xbf16>
    %c0_159 = arith.constant 0 : index
    %c8_160 = arith.constant 8 : index
    %c96_161 = arith.constant 96 : index
    %222 = vector.load %arg9[%c0_159, %c8_160, %c96_161] : memref<1x16x256xbf16, #tpu.memory_space<vmem>>, vector<1x4x16xbf16>
    %223 = vector.shape_cast %222 : vector<1x4x16xbf16> to vector<4x16xbf16>
    %224 = vector.shape_cast %221 : vector<4x16xbf16> to vector<1x4x16xbf16>
    tpu.vector_store %arg9[%c0_159, %c8_160, %c96_161], %224 {strides = array<i32>} : memref<1x16x256xbf16, #tpu.memory_space<vmem>>, vector<1x4x16xbf16>,
    %225 = vector.extract_strided_slice %209 {offsets = [3, 0, 0], sizes = [1, 4, 16], strides = [1, 1, 1]} : vector<4x4x16xbf16> to vector<1x4x16xbf16>
    %226 = vector.shape_cast %225 : vector<1x4x16xbf16> to vector<4x16xbf16>
    %c0_162 = arith.constant 0 : index
    %c12_163 = arith.constant 12 : index
    %c96_164 = arith.constant 96 : index
    %227 = vector.load %arg9[%c0_162, %c12_163, %c96_164] : memref<1x16x256xbf16, #tpu.memory_space<vmem>>, vector<1x4x16xbf16>
    %228 = vector.shape_cast %227 : vector<1x4x16xbf16> to vector<4x16xbf16>
    %229 = vector.shape_cast %226 : vector<4x16xbf16> to vector<1x4x16xbf16>
    tpu.vector_store %arg9[%c0_162, %c12_163, %c96_164], %229 {strides = array<i32>} : memref<1x16x256xbf16, #tpu.memory_space<vmem>>, vector<1x4x16xbf16>,
    %c0_165 = arith.constant 0 : index
    %c15_166 = arith.constant 15 : index
    %c1_167 = arith.constant 1 : index
    %c0_168 = arith.constant 0 : index
    %230 = vector.load %arg8[%c0_165, %c15_166, %c1_167, %c0_168] : memref<1x20x5x16xbf16, #tpu.memory_space<vmem>>, vector<1x4x4x16xbf16>
    %231 = vector.shape_cast %230 : vector<1x4x4x16xbf16> to vector<4x4x16xbf16>
    %232 = vector.extract_strided_slice %231 {offsets = [0, 0, 0], sizes = [1, 4, 16], strides = [1, 1, 1]} : vector<4x4x16xbf16> to vector<1x4x16xbf16>
    %233 = vector.shape_cast %232 : vector<1x4x16xbf16> to vector<4x16xbf16>
    %c0_169 = arith.constant 0 : index
    %c0_170 = arith.constant 0 : index
    %c112 = arith.constant 112 : index
    %234 = vector.load %arg9[%c0_169, %c0_170, %c112] : memref<1x16x256xbf16, #tpu.memory_space<vmem>>, vector<1x4x16xbf16>
    %235 = vector.shape_cast %234 : vector<1x4x16xbf16> to vector<4x16xbf16>
    %236 = vector.shape_cast %233 : vector<4x16xbf16> to vector<1x4x16xbf16>
    tpu.vector_store %arg9[%c0_169, %c0_170, %c112], %236 {strides = array<i32>} : memref<1x16x256xbf16, #tpu.memory_space<vmem>>, vector<1x4x16xbf16>,
    %237 = vector.extract_strided_slice %231 {offsets = [1, 0, 0], sizes = [1, 4, 16], strides = [1, 1, 1]} : vector<4x4x16xbf16> to vector<1x4x16xbf16>
    %238 = vector.shape_cast %237 : vector<1x4x16xbf16> to vector<4x16xbf16>
    %c0_171 = arith.constant 0 : index
    %c4_172 = arith.constant 4 : index
    %c112_173 = arith.constant 112 : index
    %239 = vector.load %arg9[%c0_171, %c4_172, %c112_173] : memref<1x16x256xbf16, #tpu.memory_space<vmem>>, vector<1x4x16xbf16>
    %240 = vector.shape_cast %239 : vector<1x4x16xbf16> to vector<4x16xbf16>
    %241 = vector.shape_cast %238 : vector<4x16xbf16> to vector<1x4x16xbf16>
    tpu.vector_store %arg9[%c0_171, %c4_172, %c112_173], %241 {strides = array<i32>} : memref<1x16x256xbf16, #tpu.memory_space<vmem>>, vector<1x4x16xbf16>,
    %242 = vector.extract_strided_slice %231 {offsets = [2, 0, 0], sizes = [1, 4, 16], strides = [1, 1, 1]} : vector<4x4x16xbf16> to vector<1x4x16xbf16>
    %243 = vector.shape_cast %242 : vector<1x4x16xbf16> to vector<4x16xbf16>
    %c0_174 = arith.constant 0 : index
    %c8_175 = arith.constant 8 : index
    %c112_176 = arith.constant 112 : index
    %244 = vector.load %arg9[%c0_174, %c8_175, %c112_176] : memref<1x16x256xbf16, #tpu.memory_space<vmem>>, vector<1x4x16xbf16>
    %245 = vector.shape_cast %244 : vector<1x4x16xbf16> to vector<4x16xbf16>
    %246 = vector.shape_cast %243 : vector<4x16xbf16> to vector<1x4x16xbf16>
    tpu.vector_store %arg9[%c0_174, %c8_175, %c112_176], %246 {strides = array<i32>} : memref<1x16x256xbf16, #tpu.memory_space<vmem>>, vector<1x4x16xbf16>,
    %247 = vector.extract_strided_slice %231 {offsets = [3, 0, 0], sizes = [1, 4, 16], strides = [1, 1, 1]} : vector<4x4x16xbf16> to vector<1x4x16xbf16>
    %248 = vector.shape_cast %247 : vector<1x4x16xbf16> to vector<4x16xbf16>
    %c0_177 = arith.constant 0 : index
    %c12_178 = arith.constant 12 : index
    %c112_179 = arith.constant 112 : index
    %249 = vector.load %arg9[%c0_177, %c12_178, %c112_179] : memref<1x16x256xbf16, #tpu.memory_space<vmem>>, vector<1x4x16xbf16>
    %250 = vector.shape_cast %249 : vector<1x4x16xbf16> to vector<4x16xbf16>
    %251 = vector.shape_cast %248 : vector<4x16xbf16> to vector<1x4x16xbf16>
    tpu.vector_store %arg9[%c0_177, %c12_178, %c112_179], %251 {strides = array<i32>} : memref<1x16x256xbf16, #tpu.memory_space<vmem>>, vector<1x4x16xbf16>,
    %c0_180 = arith.constant 0 : index
    %c1_181 = arith.constant 1 : index
    %c0_182 = arith.constant 0 : index
    %c0_183 = arith.constant 0 : index
    %252 = vector.load %arg8[%c0_180, %c1_181, %c0_182, %c0_183] : memref<1x20x5x16xbf16, #tpu.memory_space<vmem>>, vector<1x4x4x16xbf16>
    %253 = vector.shape_cast %252 : vector<1x4x4x16xbf16> to vector<4x4x16xbf16>
    %254 = vector.extract_strided_slice %253 {offsets = [0, 0, 0], sizes = [1, 4, 16], strides = [1, 1, 1]} : vector<4x4x16xbf16> to vector<1x4x16xbf16>
    %255 = vector.shape_cast %254 : vector<1x4x16xbf16> to vector<4x16xbf16>
    %c0_184 = arith.constant 0 : index
    %c0_185 = arith.constant 0 : index
    %c128 = arith.constant 128 : index
    %256 = vector.load %arg9[%c0_184, %c0_185, %c128] : memref<1x16x256xbf16, #tpu.memory_space<vmem>>, vector<1x4x16xbf16>
    %257 = vector.shape_cast %256 : vector<1x4x16xbf16> to vector<4x16xbf16>
    %258 = vector.shape_cast %255 : vector<4x16xbf16> to vector<1x4x16xbf16>
    tpu.vector_store %arg9[%c0_184, %c0_185, %c128], %258 {strides = array<i32>} : memref<1x16x256xbf16, #tpu.memory_space<vmem>>, vector<1x4x16xbf16>,
    %259 = vector.extract_strided_slice %253 {offsets = [1, 0, 0], sizes = [1, 4, 16], strides = [1, 1, 1]} : vector<4x4x16xbf16> to vector<1x4x16xbf16>
    %260 = vector.shape_cast %259 : vector<1x4x16xbf16> to vector<4x16xbf16>
    %c0_186 = arith.constant 0 : index
    %c4_187 = arith.constant 4 : index
    %c128_188 = arith.constant 128 : index
    %261 = vector.load %arg9[%c0_186, %c4_187, %c128_188] : memref<1x16x256xbf16, #tpu.memory_space<vmem>>, vector<1x4x16xbf16>
    %262 = vector.shape_cast %261 : vector<1x4x16xbf16> to vector<4x16xbf16>
    %263 = vector.shape_cast %260 : vector<4x16xbf16> to vector<1x4x16xbf16>
    tpu.vector_store %arg9[%c0_186, %c4_187, %c128_188], %263 {strides = array<i32>} : memref<1x16x256xbf16, #tpu.memory_space<vmem>>, vector<1x4x16xbf16>,
    %264 = vector.extract_strided_slice %253 {offsets = [2, 0, 0], sizes = [1, 4, 16], strides = [1, 1, 1]} : vector<4x4x16xbf16> to vector<1x4x16xbf16>
    %265 = vector.shape_cast %264 : vector<1x4x16xbf16> to vector<4x16xbf16>
    %c0_189 = arith.constant 0 : index
    %c8_190 = arith.constant 8 : index
    %c128_191 = arith.constant 128 : index
    %266 = vector.load %arg9[%c0_189, %c8_190, %c128_191] : memref<1x16x256xbf16, #tpu.memory_space<vmem>>, vector<1x4x16xbf16>
    %267 = vector.shape_cast %266 : vector<1x4x16xbf16> to vector<4x16xbf16>
    %268 = vector.shape_cast %265 : vector<4x16xbf16> to vector<1x4x16xbf16>
    tpu.vector_store %arg9[%c0_189, %c8_190, %c128_191], %268 {strides = array<i32>} : memref<1x16x256xbf16, #tpu.memory_space<vmem>>, vector<1x4x16xbf16>,
    %269 = vector.extract_strided_slice %253 {offsets = [3, 0, 0], sizes = [1, 4, 16], strides = [1, 1, 1]} : vector<4x4x16xbf16> to vector<1x4x16xbf16>
    %270 = vector.shape_cast %269 : vector<1x4x16xbf16> to vector<4x16xbf16>
    %c0_192 = arith.constant 0 : index
    %c12_193 = arith.constant 12 : index
    %c128_194 = arith.constant 128 : index
    %271 = vector.load %arg9[%c0_192, %c12_193, %c128_194] : memref<1x16x256xbf16, #tpu.memory_space<vmem>>, vector<1x4x16xbf16>
    %272 = vector.shape_cast %271 : vector<1x4x16xbf16> to vector<4x16xbf16>
    %273 = vector.shape_cast %270 : vector<4x16xbf16> to vector<1x4x16xbf16>
    tpu.vector_store %arg9[%c0_192, %c12_193, %c128_194], %273 {strides = array<i32>} : memref<1x16x256xbf16, #tpu.memory_space<vmem>>, vector<1x4x16xbf16>,
    %c0_195 = arith.constant 0 : index
    %c6_196 = arith.constant 6 : index
    %c0_197 = arith.constant 0 : index
    %c0_198 = arith.constant 0 : index
    %274 = vector.load %arg8[%c0_195, %c6_196, %c0_197, %c0_198] : memref<1x20x5x16xbf16, #tpu.memory_space<vmem>>, vector<1x4x4x16xbf16>
    %275 = vector.shape_cast %274 : vector<1x4x4x16xbf16> to vector<4x4x16xbf16>
    %276 = vector.extract_strided_slice %275 {offsets = [0, 0, 0], sizes = [1, 4, 16], strides = [1, 1, 1]} : vector<4x4x16xbf16> to vector<1x4x16xbf16>
    %277 = vector.shape_cast %276 : vector<1x4x16xbf16> to vector<4x16xbf16>
    %c0_199 = arith.constant 0 : index
    %c0_200 = arith.constant 0 : index
    %c144 = arith.constant 144 : index
    %278 = vector.load %arg9[%c0_199, %c0_200, %c144] : memref<1x16x256xbf16, #tpu.memory_space<vmem>>, vector<1x4x16xbf16>
    %279 = vector.shape_cast %278 : vector<1x4x16xbf16> to vector<4x16xbf16>
    %280 = vector.shape_cast %277 : vector<4x16xbf16> to vector<1x4x16xbf16>
    tpu.vector_store %arg9[%c0_199, %c0_200, %c144], %280 {strides = array<i32>} : memref<1x16x256xbf16, #tpu.memory_space<vmem>>, vector<1x4x16xbf16>,
    %281 = vector.extract_strided_slice %275 {offsets = [1, 0, 0], sizes = [1, 4, 16], strides = [1, 1, 1]} : vector<4x4x16xbf16> to vector<1x4x16xbf16>
    %282 = vector.shape_cast %281 : vector<1x4x16xbf16> to vector<4x16xbf16>
    %c0_201 = arith.constant 0 : index
    %c4_202 = arith.constant 4 : index
    %c144_203 = arith.constant 144 : index
    %283 = vector.load %arg9[%c0_201, %c4_202, %c144_203] : memref<1x16x256xbf16, #tpu.memory_space<vmem>>, vector<1x4x16xbf16>
    %284 = vector.shape_cast %283 : vector<1x4x16xbf16> to vector<4x16xbf16>
    %285 = vector.shape_cast %282 : vector<4x16xbf16> to vector<1x4x16xbf16>
    tpu.vector_store %arg9[%c0_201, %c4_202, %c144_203], %285 {strides = array<i32>} : memref<1x16x256xbf16, #tpu.memory_space<vmem>>, vector<1x4x16xbf16>,
    %286 = vector.extract_strided_slice %275 {offsets = [2, 0, 0], sizes = [1, 4, 16], strides = [1, 1, 1]} : vector<4x4x16xbf16> to vector<1x4x16xbf16>
    %287 = vector.shape_cast %286 : vector<1x4x16xbf16> to vector<4x16xbf16>
    %c0_204 = arith.constant 0 : index
    %c8_205 = arith.constant 8 : index
    %c144_206 = arith.constant 144 : index
    %288 = vector.load %arg9[%c0_204, %c8_205, %c144_206] : memref<1x16x256xbf16, #tpu.memory_space<vmem>>, vector<1x4x16xbf16>
    %289 = vector.shape_cast %288 : vector<1x4x16xbf16> to vector<4x16xbf16>
    %290 = vector.shape_cast %287 : vector<4x16xbf16> to vector<1x4x16xbf16>
    tpu.vector_store %arg9[%c0_204, %c8_205, %c144_206], %290 {strides = array<i32>} : memref<1x16x256xbf16, #tpu.memory_space<vmem>>, vector<1x4x16xbf16>,
    %291 = vector.extract_strided_slice %275 {offsets = [3, 0, 0], sizes = [1, 4, 16], strides = [1, 1, 1]} : vector<4x4x16xbf16> to vector<1x4x16xbf16>
    %292 = vector.shape_cast %291 : vector<1x4x16xbf16> to vector<4x16xbf16>
    %c0_207 = arith.constant 0 : index
    %c12_208 = arith.constant 12 : index
    %c144_209 = arith.constant 144 : index
    %293 = vector.load %arg9[%c0_207, %c12_208, %c144_209] : memref<1x16x256xbf16, #tpu.memory_space<vmem>>, vector<1x4x16xbf16>
    %294 = vector.shape_cast %293 : vector<1x4x16xbf16> to vector<4x16xbf16>
    %295 = vector.shape_cast %292 : vector<4x16xbf16> to vector<1x4x16xbf16>
    tpu.vector_store %arg9[%c0_207, %c12_208, %c144_209], %295 {strides = array<i32>} : memref<1x16x256xbf16, #tpu.memory_space<vmem>>, vector<1x4x16xbf16>,
    %c0_210 = arith.constant 0 : index
    %c1_211 = arith.constant 1 : index
    %c1_212 = arith.constant 1 : index
    %c0_213 = arith.constant 0 : index
    %296 = vector.load %arg8[%c0_210, %c1_211, %c1_212, %c0_213] : memref<1x20x5x16xbf16, #tpu.memory_space<vmem>>, vector<1x4x4x16xbf16>
    %297 = vector.shape_cast %296 : vector<1x4x4x16xbf16> to vector<4x4x16xbf16>
    %298 = vector.extract_strided_slice %297 {offsets = [0, 0, 0], sizes = [1, 4, 16], strides = [1, 1, 1]} : vector<4x4x16xbf16> to vector<1x4x16xbf16>
    %299 = vector.shape_cast %298 : vector<1x4x16xbf16> to vector<4x16xbf16>
    %c0_214 = arith.constant 0 : index
    %c0_215 = arith.constant 0 : index
    %c160 = arith.constant 160 : index
    %300 = vector.load %arg9[%c0_214, %c0_215, %c160] : memref<1x16x256xbf16, #tpu.memory_space<vmem>>, vector<1x4x16xbf16>
    %301 = vector.shape_cast %300 : vector<1x4x16xbf16> to vector<4x16xbf16>
    %302 = vector.shape_cast %299 : vector<4x16xbf16> to vector<1x4x16xbf16>
    tpu.vector_store %arg9[%c0_214, %c0_215, %c160], %302 {strides = array<i32>} : memref<1x16x256xbf16, #tpu.memory_space<vmem>>, vector<1x4x16xbf16>,
    %303 = vector.extract_strided_slice %297 {offsets = [1, 0, 0], sizes = [1, 4, 16], strides = [1, 1, 1]} : vector<4x4x16xbf16> to vector<1x4x16xbf16>
    %304 = vector.shape_cast %303 : vector<1x4x16xbf16> to vector<4x16xbf16>
    %c0_216 = arith.constant 0 : index
    %c4_217 = arith.constant 4 : index
    %c160_218 = arith.constant 160 : index
    %305 = vector.load %arg9[%c0_216, %c4_217, %c160_218] : memref<1x16x256xbf16, #tpu.memory_space<vmem>>, vector<1x4x16xbf16>
    %306 = vector.shape_cast %305 : vector<1x4x16xbf16> to vector<4x16xbf16>
    %307 = vector.shape_cast %304 : vector<4x16xbf16> to vector<1x4x16xbf16>
    tpu.vector_store %arg9[%c0_216, %c4_217, %c160_218], %307 {strides = array<i32>} : memref<1x16x256xbf16, #tpu.memory_space<vmem>>, vector<1x4x16xbf16>,
    %308 = vector.extract_strided_slice %297 {offsets = [2, 0, 0], sizes = [1, 4, 16], strides = [1, 1, 1]} : vector<4x4x16xbf16> to vector<1x4x16xbf16>
    %309 = vector.shape_cast %308 : vector<1x4x16xbf16> to vector<4x16xbf16>
    %c0_219 = arith.constant 0 : index
    %c8_220 = arith.constant 8 : index
    %c160_221 = arith.constant 160 : index
    %310 = vector.load %arg9[%c0_219, %c8_220, %c160_221] : memref<1x16x256xbf16, #tpu.memory_space<vmem>>, vector<1x4x16xbf16>
    %311 = vector.shape_cast %310 : vector<1x4x16xbf16> to vector<4x16xbf16>
    %312 = vector.shape_cast %309 : vector<4x16xbf16> to vector<1x4x16xbf16>
    tpu.vector_store %arg9[%c0_219, %c8_220, %c160_221], %312 {strides = array<i32>} : memref<1x16x256xbf16, #tpu.memory_space<vmem>>, vector<1x4x16xbf16>,
    %313 = vector.extract_strided_slice %297 {offsets = [3, 0, 0], sizes = [1, 4, 16], strides = [1, 1, 1]} : vector<4x4x16xbf16> to vector<1x4x16xbf16>
    %314 = vector.shape_cast %313 : vector<1x4x16xbf16> to vector<4x16xbf16>
    %c0_222 = arith.constant 0 : index
    %c12_223 = arith.constant 12 : index
    %c160_224 = arith.constant 160 : index
    %315 = vector.load %arg9[%c0_222, %c12_223, %c160_224] : memref<1x16x256xbf16, #tpu.memory_space<vmem>>, vector<1x4x16xbf16>
    %316 = vector.shape_cast %315 : vector<1x4x16xbf16> to vector<4x16xbf16>
    %317 = vector.shape_cast %314 : vector<4x16xbf16> to vector<1x4x16xbf16>
    tpu.vector_store %arg9[%c0_222, %c12_223, %c160_224], %317 {strides = array<i32>} : memref<1x16x256xbf16, #tpu.memory_space<vmem>>, vector<1x4x16xbf16>,
    %c0_225 = arith.constant 0 : index
    %c6_226 = arith.constant 6 : index
    %c1_227 = arith.constant 1 : index
    %c0_228 = arith.constant 0 : index
    %318 = vector.load %arg8[%c0_225, %c6_226, %c1_227, %c0_228] : memref<1x20x5x16xbf16, #tpu.memory_space<vmem>>, vector<1x4x4x16xbf16>
    %319 = vector.shape_cast %318 : vector<1x4x4x16xbf16> to vector<4x4x16xbf16>
    %320 = vector.extract_strided_slice %319 {offsets = [0, 0, 0], sizes = [1, 4, 16], strides = [1, 1, 1]} : vector<4x4x16xbf16> to vector<1x4x16xbf16>
    %321 = vector.shape_cast %320 : vector<1x4x16xbf16> to vector<4x16xbf16>
    %c0_229 = arith.constant 0 : index
    %c0_230 = arith.constant 0 : index
    %c176 = arith.constant 176 : index
    %322 = vector.load %arg9[%c0_229, %c0_230, %c176] : memref<1x16x256xbf16, #tpu.memory_space<vmem>>, vector<1x4x16xbf16>
    %323 = vector.shape_cast %322 : vector<1x4x16xbf16> to vector<4x16xbf16>
    %324 = vector.shape_cast %321 : vector<4x16xbf16> to vector<1x4x16xbf16>
    tpu.vector_store %arg9[%c0_229, %c0_230, %c176], %324 {strides = array<i32>} : memref<1x16x256xbf16, #tpu.memory_space<vmem>>, vector<1x4x16xbf16>,
    %325 = vector.extract_strided_slice %319 {offsets = [1, 0, 0], sizes = [1, 4, 16], strides = [1, 1, 1]} : vector<4x4x16xbf16> to vector<1x4x16xbf16>
    %326 = vector.shape_cast %325 : vector<1x4x16xbf16> to vector<4x16xbf16>
    %c0_231 = arith.constant 0 : index
    %c4_232 = arith.constant 4 : index
    %c176_233 = arith.constant 176 : index
    %327 = vector.load %arg9[%c0_231, %c4_232, %c176_233] : memref<1x16x256xbf16, #tpu.memory_space<vmem>>, vector<1x4x16xbf16>
    %328 = vector.shape_cast %327 : vector<1x4x16xbf16> to vector<4x16xbf16>
    %329 = vector.shape_cast %326 : vector<4x16xbf16> to vector<1x4x16xbf16>
    tpu.vector_store %arg9[%c0_231, %c4_232, %c176_233], %329 {strides = array<i32>} : memref<1x16x256xbf16, #tpu.memory_space<vmem>>, vector<1x4x16xbf16>,
    %330 = vector.extract_strided_slice %319 {offsets = [2, 0, 0], sizes = [1, 4, 16], strides = [1, 1, 1]} : vector<4x4x16xbf16> to vector<1x4x16xbf16>
    %331 = vector.shape_cast %330 : vector<1x4x16xbf16> to vector<4x16xbf16>
    %c0_234 = arith.constant 0 : index
    %c8_235 = arith.constant 8 : index
    %c176_236 = arith.constant 176 : index
    %332 = vector.load %arg9[%c0_234, %c8_235, %c176_236] : memref<1x16x256xbf16, #tpu.memory_space<vmem>>, vector<1x4x16xbf16>
    %333 = vector.shape_cast %332 : vector<1x4x16xbf16> to vector<4x16xbf16>
    %334 = vector.shape_cast %331 : vector<4x16xbf16> to vector<1x4x16xbf16>
    tpu.vector_store %arg9[%c0_234, %c8_235, %c176_236], %334 {strides = array<i32>} : memref<1x16x256xbf16, #tpu.memory_space<vmem>>, vector<1x4x16xbf16>,
    %335 = vector.extract_strided_slice %319 {offsets = [3, 0, 0], sizes = [1, 4, 16], strides = [1, 1, 1]} : vector<4x4x16xbf16> to vector<1x4x16xbf16>
    %336 = vector.shape_cast %335 : vector<1x4x16xbf16> to vector<4x16xbf16>
    %c0_237 = arith.constant 0 : index
    %c12_238 = arith.constant 12 : index
    %c176_239 = arith.constant 176 : index
    %337 = vector.load %arg9[%c0_237, %c12_238, %c176_239] : memref<1x16x256xbf16, #tpu.memory_space<vmem>>, vector<1x4x16xbf16>
    %338 = vector.shape_cast %337 : vector<1x4x16xbf16> to vector<4x16xbf16>
    %339 = vector.shape_cast %336 : vector<4x16xbf16> to vector<1x4x16xbf16>
    tpu.vector_store %arg9[%c0_237, %c12_238, %c176_239], %339 {strides = array<i32>} : memref<1x16x256xbf16, #tpu.memory_space<vmem>>, vector<1x4x16xbf16>,
    %c0_240 = arith.constant 0 : index
    %c11_241 = arith.constant 11 : index
    %c0_242 = arith.constant 0 : index
    %c0_243 = arith.constant 0 : index
    %340 = vector.load %arg8[%c0_240, %c11_241, %c0_242, %c0_243] : memref<1x20x5x16xbf16, #tpu.memory_space<vmem>>, vector<1x4x4x16xbf16>
    %341 = vector.shape_cast %340 : vector<1x4x4x16xbf16> to vector<4x4x16xbf16>
    %342 = vector.extract_strided_slice %341 {offsets = [0, 0, 0], sizes = [1, 4, 16], strides = [1, 1, 1]} : vector<4x4x16xbf16> to vector<1x4x16xbf16>
    %343 = vector.shape_cast %342 : vector<1x4x16xbf16> to vector<4x16xbf16>
    %c0_244 = arith.constant 0 : index
    %c0_245 = arith.constant 0 : index
    %c192 = arith.constant 192 : index
    %344 = vector.load %arg9[%c0_244, %c0_245, %c192] : memref<1x16x256xbf16, #tpu.memory_space<vmem>>, vector<1x4x16xbf16>
    %345 = vector.shape_cast %344 : vector<1x4x16xbf16> to vector<4x16xbf16>
    %346 = vector.shape_cast %343 : vector<4x16xbf16> to vector<1x4x16xbf16>
    tpu.vector_store %arg9[%c0_244, %c0_245, %c192], %346 {strides = array<i32>} : memref<1x16x256xbf16, #tpu.memory_space<vmem>>, vector<1x4x16xbf16>,
    %347 = vector.extract_strided_slice %341 {offsets = [1, 0, 0], sizes = [1, 4, 16], strides = [1, 1, 1]} : vector<4x4x16xbf16> to vector<1x4x16xbf16>
    %348 = vector.shape_cast %347 : vector<1x4x16xbf16> to vector<4x16xbf16>
    %c0_246 = arith.constant 0 : index
    %c4_247 = arith.constant 4 : index
    %c192_248 = arith.constant 192 : index
    %349 = vector.load %arg9[%c0_246, %c4_247, %c192_248] : memref<1x16x256xbf16, #tpu.memory_space<vmem>>, vector<1x4x16xbf16>
    %350 = vector.shape_cast %349 : vector<1x4x16xbf16> to vector<4x16xbf16>
    %351 = vector.shape_cast %348 : vector<4x16xbf16> to vector<1x4x16xbf16>
    tpu.vector_store %arg9[%c0_246, %c4_247, %c192_248], %351 {strides = array<i32>} : memref<1x16x256xbf16, #tpu.memory_space<vmem>>, vector<1x4x16xbf16>,
    %352 = vector.extract_strided_slice %341 {offsets = [2, 0, 0], sizes = [1, 4, 16], strides = [1, 1, 1]} : vector<4x4x16xbf16> to vector<1x4x16xbf16>
    %353 = vector.shape_cast %352 : vector<1x4x16xbf16> to vector<4x16xbf16>
    %c0_249 = arith.constant 0 : index
    %c8_250 = arith.constant 8 : index
    %c192_251 = arith.constant 192 : index
    %354 = vector.load %arg9[%c0_249, %c8_250, %c192_251] : memref<1x16x256xbf16, #tpu.memory_space<vmem>>, vector<1x4x16xbf16>
    %355 = vector.shape_cast %354 : vector<1x4x16xbf16> to vector<4x16xbf16>
    %356 = vector.shape_cast %353 : vector<4x16xbf16> to vector<1x4x16xbf16>
    tpu.vector_store %arg9[%c0_249, %c8_250, %c192_251], %356 {strides = array<i32>} : memref<1x16x256xbf16, #tpu.memory_space<vmem>>, vector<1x4x16xbf16>,
    %357 = vector.extract_strided_slice %341 {offsets = [3, 0, 0], sizes = [1, 4, 16], strides = [1, 1, 1]} : vector<4x4x16xbf16> to vector<1x4x16xbf16>
    %358 = vector.shape_cast %357 : vector<1x4x16xbf16> to vector<4x16xbf16>
    %c0_252 = arith.constant 0 : index
    %c12_253 = arith.constant 12 : index
    %c192_254 = arith.constant 192 : index
    %359 = vector.load %arg9[%c0_252, %c12_253, %c192_254] : memref<1x16x256xbf16, #tpu.memory_space<vmem>>, vector<1x4x16xbf16>
    %360 = vector.shape_cast %359 : vector<1x4x16xbf16> to vector<4x16xbf16>
    %361 = vector.shape_cast %358 : vector<4x16xbf16> to vector<1x4x16xbf16>
    tpu.vector_store %arg9[%c0_252, %c12_253, %c192_254], %361 {strides = array<i32>} : memref<1x16x256xbf16, #tpu.memory_space<vmem>>, vector<1x4x16xbf16>,
    %c0_255 = arith.constant 0 : index
    %c16_256 = arith.constant 16 : index
    %c0_257 = arith.constant 0 : index
    %c0_258 = arith.constant 0 : index
    %362 = vector.load %arg8[%c0_255, %c16_256, %c0_257, %c0_258] : memref<1x20x5x16xbf16, #tpu.memory_space<vmem>>, vector<1x4x4x16xbf16>
    %363 = vector.shape_cast %362 : vector<1x4x4x16xbf16> to vector<4x4x16xbf16>
    %364 = vector.extract_strided_slice %363 {offsets = [0, 0, 0], sizes = [1, 4, 16], strides = [1, 1, 1]} : vector<4x4x16xbf16> to vector<1x4x16xbf16>
    %365 = vector.shape_cast %364 : vector<1x4x16xbf16> to vector<4x16xbf16>
    %c0_259 = arith.constant 0 : index
    %c0_260 = arith.constant 0 : index
    %c208 = arith.constant 208 : index
    %366 = vector.load %arg9[%c0_259, %c0_260, %c208] : memref<1x16x256xbf16, #tpu.memory_space<vmem>>, vector<1x4x16xbf16>
    %367 = vector.shape_cast %366 : vector<1x4x16xbf16> to vector<4x16xbf16>
    %368 = vector.shape_cast %365 : vector<4x16xbf16> to vector<1x4x16xbf16>
    tpu.vector_store %arg9[%c0_259, %c0_260, %c208], %368 {strides = array<i32>} : memref<1x16x256xbf16, #tpu.memory_space<vmem>>, vector<1x4x16xbf16>,
    %369 = vector.extract_strided_slice %363 {offsets = [1, 0, 0], sizes = [1, 4, 16], strides = [1, 1, 1]} : vector<4x4x16xbf16> to vector<1x4x16xbf16>
    %370 = vector.shape_cast %369 : vector<1x4x16xbf16> to vector<4x16xbf16>
    %c0_261 = arith.constant 0 : index
    %c4_262 = arith.constant 4 : index
    %c208_263 = arith.constant 208 : index
    %371 = vector.load %arg9[%c0_261, %c4_262, %c208_263] : memref<1x16x256xbf16, #tpu.memory_space<vmem>>, vector<1x4x16xbf16>
    %372 = vector.shape_cast %371 : vector<1x4x16xbf16> to vector<4x16xbf16>
    %373 = vector.shape_cast %370 : vector<4x16xbf16> to vector<1x4x16xbf16>
    tpu.vector_store %arg9[%c0_261, %c4_262, %c208_263], %373 {strides = array<i32>} : memref<1x16x256xbf16, #tpu.memory_space<vmem>>, vector<1x4x16xbf16>,
    %374 = vector.extract_strided_slice %363 {offsets = [2, 0, 0], sizes = [1, 4, 16], strides = [1, 1, 1]} : vector<4x4x16xbf16> to vector<1x4x16xbf16>
    %375 = vector.shape_cast %374 : vector<1x4x16xbf16> to vector<4x16xbf16>
    %c0_264 = arith.constant 0 : index
    %c8_265 = arith.constant 8 : index
    %c208_266 = arith.constant 208 : index
    %376 = vector.load %arg9[%c0_264, %c8_265, %c208_266] : memref<1x16x256xbf16, #tpu.memory_space<vmem>>, vector<1x4x16xbf16>
    %377 = vector.shape_cast %376 : vector<1x4x16xbf16> to vector<4x16xbf16>
    %378 = vector.shape_cast %375 : vector<4x16xbf16> to vector<1x4x16xbf16>
    tpu.vector_store %arg9[%c0_264, %c8_265, %c208_266], %378 {strides = array<i32>} : memref<1x16x256xbf16, #tpu.memory_space<vmem>>, vector<1x4x16xbf16>,
    %379 = vector.extract_strided_slice %363 {offsets = [3, 0, 0], sizes = [1, 4, 16], strides = [1, 1, 1]} : vector<4x4x16xbf16> to vector<1x4x16xbf16>
    %380 = vector.shape_cast %379 : vector<1x4x16xbf16> to vector<4x16xbf16>
    %c0_267 = arith.constant 0 : index
    %c12_268 = arith.constant 12 : index
    %c208_269 = arith.constant 208 : index
    %381 = vector.load %arg9[%c0_267, %c12_268, %c208_269] : memref<1x16x256xbf16, #tpu.memory_space<vmem>>, vector<1x4x16xbf16>
    %382 = vector.shape_cast %381 : vector<1x4x16xbf16> to vector<4x16xbf16>
    %383 = vector.shape_cast %380 : vector<4x16xbf16> to vector<1x4x16xbf16>
    tpu.vector_store %arg9[%c0_267, %c12_268, %c208_269], %383 {strides = array<i32>} : memref<1x16x256xbf16, #tpu.memory_space<vmem>>, vector<1x4x16xbf16>,
    %c0_270 = arith.constant 0 : index
    %c11_271 = arith.constant 11 : index
    %c1_272 = arith.constant 1 : index
    %c0_273 = arith.constant 0 : index
    %384 = vector.load %arg8[%c0_270, %c11_271, %c1_272, %c0_273] : memref<1x20x5x16xbf16, #tpu.memory_space<vmem>>, vector<1x4x4x16xbf16>
    %385 = vector.shape_cast %384 : vector<1x4x4x16xbf16> to vector<4x4x16xbf16>
    %386 = vector.extract_strided_slice %385 {offsets = [0, 0, 0], sizes = [1, 4, 16], strides = [1, 1, 1]} : vector<4x4x16xbf16> to vector<1x4x16xbf16>
    %387 = vector.shape_cast %386 : vector<1x4x16xbf16> to vector<4x16xbf16>
    %c0_274 = arith.constant 0 : index
    %c0_275 = arith.constant 0 : index
    %c224 = arith.constant 224 : index
    %388 = vector.load %arg9[%c0_274, %c0_275, %c224] : memref<1x16x256xbf16, #tpu.memory_space<vmem>>, vector<1x4x16xbf16>
    %389 = vector.shape_cast %388 : vector<1x4x16xbf16> to vector<4x16xbf16>
    %390 = vector.shape_cast %387 : vector<4x16xbf16> to vector<1x4x16xbf16>
    tpu.vector_store %arg9[%c0_274, %c0_275, %c224], %390 {strides = array<i32>} : memref<1x16x256xbf16, #tpu.memory_space<vmem>>, vector<1x4x16xbf16>,
    %391 = vector.extract_strided_slice %385 {offsets = [1, 0, 0], sizes = [1, 4, 16], strides = [1, 1, 1]} : vector<4x4x16xbf16> to vector<1x4x16xbf16>
    %392 = vector.shape_cast %391 : vector<1x4x16xbf16> to vector<4x16xbf16>
    %c0_276 = arith.constant 0 : index
    %c4_277 = arith.constant 4 : index
    %c224_278 = arith.constant 224 : index
    %393 = vector.load %arg9[%c0_276, %c4_277, %c224_278] : memref<1x16x256xbf16, #tpu.memory_space<vmem>>, vector<1x4x16xbf16>
    %394 = vector.shape_cast %393 : vector<1x4x16xbf16> to vector<4x16xbf16>
    %395 = vector.shape_cast %392 : vector<4x16xbf16> to vector<1x4x16xbf16>
    tpu.vector_store %arg9[%c0_276, %c4_277, %c224_278], %395 {strides = array<i32>} : memref<1x16x256xbf16, #tpu.memory_space<vmem>>, vector<1x4x16xbf16>,
    %396 = vector.extract_strided_slice %385 {offsets = [2, 0, 0], sizes = [1, 4, 16], strides = [1, 1, 1]} : vector<4x4x16xbf16> to vector<1x4x16xbf16>
    %397 = vector.shape_cast %396 : vector<1x4x16xbf16> to vector<4x16xbf16>
    %c0_279 = arith.constant 0 : index
    %c8_280 = arith.constant 8 : index
    %c224_281 = arith.constant 224 : index
    %398 = vector.load %arg9[%c0_279, %c8_280, %c224_281] : memref<1x16x256xbf16, #tpu.memory_space<vmem>>, vector<1x4x16xbf16>
    %399 = vector.shape_cast %398 : vector<1x4x16xbf16> to vector<4x16xbf16>
    %400 = vector.shape_cast %397 : vector<4x16xbf16> to vector<1x4x16xbf16>
    tpu.vector_store %arg9[%c0_279, %c8_280, %c224_281], %400 {strides = array<i32>} : memref<1x16x256xbf16, #tpu.memory_space<vmem>>, vector<1x4x16xbf16>,
    %401 = vector.extract_strided_slice %385 {offsets = [3, 0, 0], sizes = [1, 4, 16], strides = [1, 1, 1]} : vector<4x4x16xbf16> to vector<1x4x16xbf16>
    %402 = vector.shape_cast %401 : vector<1x4x16xbf16> to vector<4x16xbf16>
    %c0_282 = arith.constant 0 : index
    %c12_283 = arith.constant 12 : index
    %c224_284 = arith.constant 224 : index
    %403 = vector.load %arg9[%c0_282, %c12_283, %c224_284] : memref<1x16x256xbf16, #tpu.memory_space<vmem>>, vector<1x4x16xbf16>
    %404 = vector.shape_cast %403 : vector<1x4x16xbf16> to vector<4x16xbf16>
    %405 = vector.shape_cast %402 : vector<4x16xbf16> to vector<1x4x16xbf16>
    tpu.vector_store %arg9[%c0_282, %c12_283, %c224_284], %405 {strides = array<i32>} : memref<1x16x256xbf16, #tpu.memory_space<vmem>>, vector<1x4x16xbf16>,
    %c0_285 = arith.constant 0 : index
    %c16_286 = arith.constant 16 : index
    %c1_287 = arith.constant 1 : index
    %c0_288 = arith.constant 0 : index
    %406 = vector.load %arg8[%c0_285, %c16_286, %c1_287, %c0_288] : memref<1x20x5x16xbf16, #tpu.memory_space<vmem>>, vector<1x4x4x16xbf16>
    %407 = vector.shape_cast %406 : vector<1x4x4x16xbf16> to vector<4x4x16xbf16>
    %408 = vector.extract_strided_slice %407 {offsets = [0, 0, 0], sizes = [1, 4, 16], strides = [1, 1, 1]} : vector<4x4x16xbf16> to vector<1x4x16xbf16>
    %409 = vector.shape_cast %408 : vector<1x4x16xbf16> to vector<4x16xbf16>
    %c0_289 = arith.constant 0 : index
    %c0_290 = arith.constant 0 : index
    %c240 = arith.constant 240 : index
    %410 = vector.load %arg9[%c0_289, %c0_290, %c240] : memref<1x16x256xbf16, #tpu.memory_space<vmem>>, vector<1x4x16xbf16>
    %411 = vector.shape_cast %410 : vector<1x4x16xbf16> to vector<4x16xbf16>
    %412 = vector.shape_cast %409 : vector<4x16xbf16> to vector<1x4x16xbf16>
    tpu.vector_store %arg9[%c0_289, %c0_290, %c240], %412 {strides = array<i32>} : memref<1x16x256xbf16, #tpu.memory_space<vmem>>, vector<1x4x16xbf16>,
    %413 = vector.extract_strided_slice %407 {offsets = [1, 0, 0], sizes = [1, 4, 16], strides = [1, 1, 1]} : vector<4x4x16xbf16> to vector<1x4x16xbf16>
    %414 = vector.shape_cast %413 : vector<1x4x16xbf16> to vector<4x16xbf16>
    %c0_291 = arith.constant 0 : index
    %c4_292 = arith.constant 4 : index
    %c240_293 = arith.constant 240 : index
    %415 = vector.load %arg9[%c0_291, %c4_292, %c240_293] : memref<1x16x256xbf16, #tpu.memory_space<vmem>>, vector<1x4x16xbf16>
    %416 = vector.shape_cast %415 : vector<1x4x16xbf16> to vector<4x16xbf16>
    %417 = vector.shape_cast %414 : vector<4x16xbf16> to vector<1x4x16xbf16>
    tpu.vector_store %arg9[%c0_291, %c4_292, %c240_293], %417 {strides = array<i32>} : memref<1x16x256xbf16, #tpu.memory_space<vmem>>, vector<1x4x16xbf16>,
    %418 = vector.extract_strided_slice %407 {offsets = [2, 0, 0], sizes = [1, 4, 16], strides = [1, 1, 1]} : vector<4x4x16xbf16> to vector<1x4x16xbf16>
    %419 = vector.shape_cast %418 : vector<1x4x16xbf16> to vector<4x16xbf16>
    %c0_294 = arith.constant 0 : index
    %c8_295 = arith.constant 8 : index
    %c240_296 = arith.constant 240 : index
    %420 = vector.load %arg9[%c0_294, %c8_295, %c240_296] : memref<1x16x256xbf16, #tpu.memory_space<vmem>>, vector<1x4x16xbf16>
    %421 = vector.shape_cast %420 : vector<1x4x16xbf16> to vector<4x16xbf16>
    %422 = vector.shape_cast %419 : vector<4x16xbf16> to vector<1x4x16xbf16>
    tpu.vector_store %arg9[%c0_294, %c8_295, %c240_296], %422 {strides = array<i32>} : memref<1x16x256xbf16, #tpu.memory_space<vmem>>, vector<1x4x16xbf16>,
    %423 = vector.extract_strided_slice %407 {offsets = [3, 0, 0], sizes = [1, 4, 16], strides = [1, 1, 1]} : vector<4x4x16xbf16> to vector<1x4x16xbf16>
    %424 = vector.shape_cast %423 : vector<1x4x16xbf16> to vector<4x16xbf16>
    %c0_297 = arith.constant 0 : index
    %c12_298 = arith.constant 12 : index
    %c240_299 = arith.constant 240 : index
    %425 = vector.load %arg9[%c0_297, %c12_298, %c240_299] : memref<1x16x256xbf16, #tpu.memory_space<vmem>>, vector<1x4x16xbf16>
    %426 = vector.shape_cast %425 : vector<1x4x16xbf16> to vector<4x16xbf16>
    %427 = vector.shape_cast %424 : vector<4x16xbf16> to vector<1x4x16xbf16>
    tpu.vector_store %arg9[%c0_297, %c12_298, %c240_299], %427 {strides = array<i32>} : memref<1x16x256xbf16, #tpu.memory_space<vmem>>, vector<1x4x16xbf16>,
    %c0_300 = arith.constant 0 : index
    %c0_301 = arith.constant 0 : index
    %c0_302 = arith.constant 0 : index
    %428 = vector.load %arg9[%c0_300, %c0_301, %c0_302] : memref<1x16x256xbf16, #tpu.memory_space<vmem>>, vector<1x16x256xbf16>
    %429 = vector.shape_cast %428 : vector<1x16x256xbf16> to vector<16x256xbf16>
    %c0_303 = arith.constant 0 : index
    %c0_304 = arith.constant 0 : index
    %430 = vector.load %arg3[%c0_303, %c0_304] : memref<256x32xbf16, #tpu.memory_space<vmem>>, vector<256x32xbf16>
    %cst_305 = arith.constant dense<0.000000e+00> : vector<16x32xf32>
    %431 = tpu.matmul %429, %430, %cst_305 {dimension_numbers = #tpu.dot_dimension_numbers<[1], [0], [0], [1], [0, 0, 1, 1], [], []>} : vector<16x256xbf16>, vector<256x32xbf16>, vector<16x32xf32> -> vector<16x32xf32>
    %c0_306 = arith.constant 0 : index
    %c0_307 = arith.constant 0 : index
    %432 = vector.load %arg4[%c0_306, %c0_307] : memref<1x32xf32, #tpu.memory_space<vmem>>, vector<1x32xf32>
    %c0_308 = arith.constant 0 : index
    %c0_309 = arith.constant 0 : index
    %433 = vector.load %arg5[%c0_308, %c0_309] : memref<1x32xf32, #tpu.memory_space<vmem>>, vector<1x32xf32>
    %c0_310 = arith.constant 0 : index
    %c0_311 = arith.constant 0 : index
    %434 = vector.load %arg6[%c0_310, %c0_311] : memref<16x32xf32, #tpu.memory_space<vmem>>, vector<16x32xf32>
    %cst_312 = arith.constant dense<0.000000e+00> : vector<32xf32>
    %435 = vector.multi_reduction <add>, %431, %cst_312 [0] : vector<16x32xf32> to vector<32xf32>
    %436 = vector.shape_cast %435 : vector<32xf32> to vector<1x32xf32>
    %cst_313 = arith.constant 1.600000e+01 : f32
    %437 = vector.broadcast %cst_313 : f32 to vector<1x32xf32>
    %438 = arith.divf %436, %437 : vector<1x32xf32>
    %439 = vector.broadcast %438 : vector<1x32xf32> to vector<16x32xf32>
    %440 = arith.subf %431, %439 : vector<16x32xf32>
    %441 = arith.mulf %440, %440 : vector<16x32xf32>
    %cst_314 = arith.constant dense<0.000000e+00> : vector<32xf32>
    %442 = vector.multi_reduction <add>, %441, %cst_314 [0] : vector<16x32xf32> to vector<32xf32>
    %443 = vector.shape_cast %442 : vector<32xf32> to vector<1x32xf32>
    %cst_315 = arith.constant 1.600000e+01 : f32
    %444 = vector.broadcast %cst_315 : f32 to vector<1x32xf32>
    %445 = arith.divf %443, %444 : vector<1x32xf32>
    %cst_316 = arith.constant 9.99999974E-6 : f32
    %446 = vector.broadcast %cst_316 : f32 to vector<1x32xf32>
    %447 = arith.addf %445, %446 : vector<1x32xf32>
    %448 = math.rsqrt %447 : vector<1x32xf32>
    %449 = vector.broadcast %448 : vector<1x32xf32> to vector<16x32xf32>
    %450 = arith.mulf %440, %449 : vector<16x32xf32>
    %451 = vector.broadcast %432 : vector<1x32xf32> to vector<16x32xf32>
    %452 = arith.mulf %450, %451 : vector<16x32xf32>
    %453 = vector.broadcast %433 : vector<1x32xf32> to vector<16x32xf32>
    %454 = arith.addf %452, %453 : vector<16x32xf32>
    %cst_317 = arith.constant 0.000000e+00 : f32
    %455 = vector.broadcast %cst_317 : f32 to vector<16x32xf32>
    %456 = arith.cmpf oge, %454, %455 : vector<16x32xf32>
    %cst_318 = arith.constant 2.000000e-01 : f32
    %457 = vector.broadcast %cst_318 : f32 to vector<16x32xf32>
    %458 = arith.mulf %457, %454 : vector<16x32xf32>
    %459 = arith.select %456, %454, %458 : vector<16x32xi1>, vector<16x32xf32>
    %460 = arith.mulf %459, %434 : vector<16x32xf32>
    %cst_319 = arith.constant dense<0.000000e+00> : vector<16xf32>
    %461 = vector.multi_reduction <add>, %460, %cst_319 [1] : vector<16x32xf32> to vector<16xf32>
    %462 = vector.shape_cast %461 : vector<16xf32> to vector<16x1xf32>
    %cst_320 = arith.constant dense<0.000000e+00> : vector<1xf32>
    %463 = vector.multi_reduction <add>, %462, %cst_320 [0] : vector<16x1xf32> to vector<1xf32>
    %464 = vector.shape_cast %463 : vector<1xf32> to vector<1x1xf32>
    %c0_321 = arith.constant 0 : index
    %c0_322 = arith.constant 0 : index
    %c0_323 = arith.constant 0 : index
    %465 = vector.load %arg7[%c0_321, %c0_322, %c0_323] : memref<1x1x1xf32, #tpu.memory_space<vmem>>, vector<1x1x1xf32>
    %466 = vector.shape_cast %465 : vector<1x1x1xf32> to vector<1x1xf32>
    %467 = vector.shape_cast %464 : vector<1x1xf32> to vector<1x1x1xf32>
    tpu.vector_store %arg7[%c0_321, %c0_322, %c0_323], %467 {strides = array<i32>} : memref<1x1x1xf32, #tpu.memory_space<vmem>>, vector<1x1x1xf32>,
    return
  }
  func.func @transform_0(%arg0: i32) -> (i32, i32, i32) {
    %c0_i32 = arith.constant 0 : i32
    %c0_i32_0 = arith.constant 0 : i32
    %c0_i32_1 = arith.constant 0 : i32
    return %arg0, %c0_i32, %c0_i32_0 : i32, i32, i32
  }
  func.func @transform_1(%arg0: i32) -> (i32, i32) {
    %c0_i32 = arith.constant 0 : i32
    %c0_i32_0 = arith.constant 0 : i32
    %c0_i32_1 = arith.constant 0 : i32
    return %c0_i32, %c0_i32_0 : i32, i32
  }
  func.func @transform_2(%arg0: i32) -> (i32, i32) {
    %c0_i32 = arith.constant 0 : i32
    %c0_i32_0 = arith.constant 0 : i32
    %c0_i32_1 = arith.constant 0 : i32
    return %c0_i32, %c0_i32_0 : i32, i32
  }
  func.func @transform_3(%arg0: i32) -> (i32, i32) {
    %c0_i32 = arith.constant 0 : i32
    %c0_i32_0 = arith.constant 0 : i32
    %c0_i32_1 = arith.constant 0 : i32
    return %c0_i32, %c0_i32_0 : i32, i32
  }
  func.func @transform_4(%arg0: i32) -> (i32, i32) {
    %c0_i32 = arith.constant 0 : i32
    %c0_i32_0 = arith.constant 0 : i32
    %c0_i32_1 = arith.constant 0 : i32
    return %c0_i32, %c0_i32_0 : i32, i32
  }
  func.func @transform_5(%arg0: i32) -> (i32, i32) {
    %c0_i32 = arith.constant 0 : i32
    %c0_i32_0 = arith.constant 0 : i32
    %c0_i32_1 = arith.constant 0 : i32
    return %c0_i32, %c0_i32_0 : i32, i32
  }
  func.func @transform_6(%arg0: i32) -> (i32, i32, i32) {
    %c0_i32 = arith.constant 0 : i32
    %c0_i32_0 = arith.constant 0 : i32
    %c0_i32_1 = arith.constant 0 : i32
    return %arg0, %c0_i32, %c0_i32_0 : i32, i32, i32
  }
}

</mosaic_0001>

<llo_original>
// kernel: discriminator_forward.1
$region0: #{discriminator_forward.1}
  #allocation0 [shape = 'u32[]', space=smem, size = 0x4, offset = 0x4, fixed_abs, tag = 'smem constant byte address 0x4 - core index']
  #allocation1 [shape = 'u32[72,128]{1,0:T(1,128)}', space=vmem, size = 0x9000, scoped, tag = 'internal scratch']
  #allocation2 [shape = 'bf16[1,20,5,16]{3,2,1,0:T(8,128)(2,1)}', space=vmem, size = 0xa000, scoped, tag = 'scratch operand']
  #allocation3 [shape = 'bf16[1,16,256]{2,1,0:T(8,128)(2,1)}', space=vmem, size = 0x2000, scoped, tag = 'scratch operand']
  %s0 = inlined_call_operand.vmem [shape: bf16[2,64,48], index: 0, kind: input, shape index: {}]
  %s1 = inlined_call_operand.vmem [shape: bf16[48,16], index: 1, kind: input, shape index: {}]
  %s2 = inlined_call_operand.vmem [shape: bf16[256,32], index: 2, kind: input, shape index: {}]
  %s3 = inlined_call_operand.vmem [shape: f32[1,32], index: 3, kind: input, shape index: {}]
  %s4 = inlined_call_operand.vmem [shape: f32[1,32], index: 4, kind: input, shape index: {}]
  %s5 = inlined_call_operand.vmem [shape: f32[16,32], index: 5, kind: input, shape index: {}]
  %s6 = inlined_call_operand.vmem [shape: f32[2,1,1], index: 6, kind: output, shape index: {}]
  %s7 = sld [smem:[#allocation0]]
  $region57: #{discriminator_forward.1} parent=0
    _
  %s9 = ssub.s32 1, %s7
  %s10 = scalar_select 0, %s9, %s7
  loop: start=0, step=1, limit=4
  $region2: #{discriminator_forward.1} parent=0 // loop_pre_header
    _
  $region3: #{discriminator_forward.1} parent=0 // loop_header
    %s12 = sphi 0, %s16
    %p13 = scmp.ge.s32.totalorder %s12, 4
    %s22 = sphi 0, %s24
    %s25 = sphi 0, %s22
    %s26 = sphi 0, %s25
    %s42 = sphi 0, %s26
    %s46 = sphi 0, %s46
    %s48 = sphi 0, %s46
    %s49 = sphi 0, %s48
    %s63 = sphi 0, %s49
    %s67 = sphi 0, %s67
    %s69 = sphi 0, %s67
    %s70 = sphi 0, %s69
    %s84 = sphi 0, %s70
    %s88 = sphi 0, %s88
    %s90 = sphi 0, %s88
    %s91 = sphi 0, %s90
    %s105 = sphi 0, %s91
    %s109 = sphi 0, %s109
    %s111 = sphi 0, %s109
    %s112 = sphi 0, %s111
    %s126 = sphi 0, %s112
    %s130 = sphi 0, %s130
    %s132 = sphi 0, %s130
    %s133 = sphi 0, %s132
    %s147 = sphi 0, %s133
    %s153 = sphi 0, %s155
    %s156 = sphi 0, %s153
    %s157 = sphi 0, %s156
    %s173 = sphi 0, %s157
  $region4: #{discriminator_forward.1} parent=0 // loop_header_branch
    %15 = sbr.rel (%p13) target = $region8
  $region5: #{discriminator_forward.1} parent=0 // loop_body
    %s17 = ssub.s32 %s12, 1
    %s18 = ssub.s32 %s12, 2
    %s19 = sadd.s32 %s12, 1
    %s20 = ssub.s32 %s12, %s19
    %p21 = scmp.eq.s32.totalorder %s20, 0
    %s23 = sadd.s32 %s22, 1
    %s24 = scalar_select %p21, %s22, %s23
    %p27 = pneg %p21
    %p28 = scmp.eq.s32.totalorder %s12, 1
    %p29 = por %p27, %p28
    %p30 = scmp.ne.s32.totalorder %s22, %s25
    %p31 = scmp.eq.s32.totalorder %s12, 0
    %p32 = por %p30, %p31
    %p33 = scmp.ne.s32.totalorder %s22, %s25
    %p34 = scmp.eq.s32.totalorder %s17, 1
    %p35 = por %p33, %p34
    %p36 = scmp.ne.s32.totalorder %s25, %s26
    %p37 = scmp.eq.s32.totalorder %s17, 0
    %p38 = por %p36, %p37
    %p39 = scmp.ne.s32.totalorder %s25, %s26
    %p40 = scmp.eq.s32.totalorder %s18, 1
    %p41 = por %p39, %p40
    %p43 = scmp.ne.s32.totalorder %s26, %s42
    %p44 = scmp.eq.s32.totalorder %s18, 0
    %p45 = por %p43, %p44
    %s47 = sadd.s32 %s46, 1
    %p50 = scmp.eq.s32.totalorder %s12, 1
    %p51 = scmp.ne.s32.totalorder %s46, %s48
    %p52 = scmp.eq.s32.totalorder %s12, 0
    %p53 = por %p51, %p52
    %p54 = scmp.ne.s32.totalorder %s46, %s48
    %p55 = scmp.eq.s32.totalorder %s17, 1
    %p56 = por %p54, %p55
    %p57 = scmp.ne.s32.totalorder %s48, %s49
    %p58 = scmp.eq.s32.totalorder %s17, 0
    %p59 = por %p57, %p58
    %p60 = scmp.ne.s32.totalorder %s48, %s49
    %p61 = scmp.eq.s32.totalorder %s18, 1
    %p62 = por %p60, %p61
    %p64 = scmp.ne.s32.totalorder %s49, %s63
    %p65 = scmp.eq.s32.totalorder %s18, 0
    %p66 = por %p64, %p65
    %s68 = sadd.s32 %s67, 1
    %p71 = scmp.eq.s32.totalorder %s12, 1
    %p72 = scmp.ne.s32.totalorder %s67, %s69
    %p73 = scmp.eq.s32.totalorder %s12, 0
    %p74 = por %p72, %p73
    %p75 = scmp.ne.s32.totalorder %s67, %s69
    %p76 = scmp.eq.s32.totalorder %s17, 1
    %p77 = por %p75, %p76
    %p78 = scmp.ne.s32.totalorder %s69, %s70
    %p79 = scmp.eq.s32.totalorder %s17, 0
    %p80 = por %p78, %p79
    %p81 = scmp.ne.s32.totalorder %s69, %s70
    %p82 = scmp.eq.s32.totalorder %s18, 1
    %p83 = por %p81, %p82
    %p85 = scmp.ne.s32.totalorder %s70, %s84
    %p86 = scmp.eq.s32.totalorder %s18, 0
    %p87 = por %p85, %p86
    %s89 = sadd.s32 %s88, 1
    %p92 = scmp.eq.s32.totalorder %s12, 1
    %p93 = scmp.ne.s32.totalorder %s88, %s90
    %p94 = scmp.eq.s32.totalorder %s12, 0
    %p95 = por %p93, %p94
    %p96 = scmp.ne.s32.totalorder %s88, %s90
    %p97 = scmp.eq.s32.totalorder %s17, 1
    %p98 = por %p96, %p97
    %p99 = scmp.ne.s32.totalorder %s90, %s91
    %p100 = scmp.eq.s32.totalorder %s17, 0
    %p101 = por %p99, %p100
    %p102 = scmp.ne.s32.totalorder %s90, %s91
    %p103 = scmp.eq.s32.totalorder %s18, 1
    %p104 = por %p102, %p103
    %p106 = scmp.ne.s32.totalorder %s91, %s105
    %p107 = scmp.eq.s32.totalorder %s18, 0
    %p108 = por %p106, %p107
    %s110 = sadd.s32 %s109, 1
    %p113 = scmp.eq.s32.totalorder %s12, 1
    %p114 = scmp.ne.s32.totalorder %s109, %s111
    %p115 = scmp.eq.s32.totalorder %s12, 0
    %p116 = por %p114, %p115
    %p117 = scmp.ne.s32.totalorder %s109, %s111
    %p118 = scmp.eq.s32.totalorder %s17, 1
    %p119 = por %p117, %p118
    %p120 = scmp.ne.s32.totalorder %s111, %s112
    %p121 = scmp.eq.s32.totalorder %s17, 0
    %p122 = por %p120, %p121
    %p123 = scmp.ne.s32.totalorder %s111, %s112
    %p124 = scmp.eq.s32.totalorder %s18, 1
    %p125 = por %p123, %p124
    %p127 = scmp.ne.s32.totalorder %s112, %s126
    %p128 = scmp.eq.s32.totalorder %s18, 0
    %p129 = por %p127, %p128
    %s131 = sadd.s32 %s130, 1
    %p134 = scmp.eq.s32.totalorder %s12, 1
    %p135 = scmp.ne.s32.totalorder %s130, %s132
    %p136 = scmp.eq.s32.totalorder %s12, 0
    %p137 = por %p135, %p136
    %p138 = scmp.ne.s32.totalorder %s130, %s132
    %p139 = scmp.eq.s32.totalorder %s17, 1
    %p140 = por %p138, %p139
    %p141 = scmp.ne.s32.totalorder %s132, %s133
    %p142 = scmp.eq.s32.totalorder %s17, 0
    %p143 = por %p141, %p142
    %p144 = scmp.ne.s32.totalorder %s132, %s133
    %p145 = scmp.eq.s32.totalorder %s18, 1
    %p146 = por %p144, %p145
    %p148 = scmp.ne.s32.totalorder %s133, %s147
    %p149 = scmp.eq.s32.totalorder %s18, 0
    %p150 = por %p148, %p149
    %s151 = ssub.s32 %s12, %s19
    %p152 = scmp.eq.s32.totalorder %s151, 0
    %s154 = sadd.s32 %s153, 1
    %s155 = scalar_select %p152, %s153, %s154
    %p158 = pneg %p152
    %p159 = scmp.eq.s32.totalorder %s12, 1
    %p160 = por %p158, %p159
    %p161 = scmp.ne.s32.totalorder %s153, %s156
    %p162 = scmp.eq.s32.totalorder %s12, 0
    %p163 = por %p161, %p162
    %p164 = scmp.ne.s32.totalorder %s153, %s156
    %p165 = scmp.eq.s32.totalorder %s17, 1
    %p166 = por %p164, %p165
    %p167 = scmp.ne.s32.totalorder %s156, %s157
    %p168 = scmp.eq.s32.totalorder %s17, 0
    %p169 = por %p167, %p168
    %p170 = scmp.ne.s32.totalorder %s156, %s157
    %p171 = scmp.eq.s32.totalorder %s18, 1
    %p172 = por %p170, %p171
    %p174 = scmp.ne.s32.totalorder %s157, %s173
    %p175 = scmp.eq.s32.totalorder %s18, 0
    %p176 = por %p174, %p175
    %p177 = scmp.le.s32.totalorder 1, %s12
    %p178 = scmp.lt.s32.totalorder %s12, 3
    %p179 = pnand %p177, %p178
    %p180 = pneg %p179
    // Predicated region
    $region9: #{discriminator_forward.1} parent=5 // pred_check
      _
    $region10: #{discriminator_forward.1} parent=5 // pred_check_branch
      %182 = sbr.rel (%p179) target = $region12
    $region11: #{discriminator_forward.1} parent=5 // pred_region
      %s183 = ssub.s32 %s12, 1
      // Predicated region
      $region13: #{discriminator_forward.1} parent=11 // pred_check
        %p184 = pneg %p59
      $region14: #{discriminator_forward.1} parent=11 // pred_check_branch
        %186 = sbr.rel (%p184) target = $region16
      $region15: #{discriminator_forward.1} parent=11 // pred_region
        _
      $region16: #{discriminator_forward.1} parent=11 // pred_fallthru
        _
      // Predicated region
      $region17: #{discriminator_forward.1} parent=11 // pred_check
        %p187 = pneg %p80
      $region18: #{discriminator_forward.1} parent=11 // pred_check_branch
        %189 = sbr.rel (%p187) target = $region20
      $region19: #{discriminator_forward.1} parent=11 // pred_region
        _
      $region20: #{discriminator_forward.1} parent=11 // pred_fallthru
        _
      // Predicated region
      $region21: #{discriminator_forward.1} parent=11 // pred_check
        %p190 = pneg %p101
      $region22: #{discriminator_forward.1} parent=11 // pred_check_branch
        %192 = sbr.rel (%p190) target = $region24
      $region23: #{discriminator_forward.1} parent=11 // pred_region
        _
      $region24: #{discriminator_forward.1} parent=11 // pred_fallthru
        _
      // Predicated region
      $region25: #{discriminator_forward.1} parent=11 // pred_check
        %p193 = pneg %p122
      $region26: #{discriminator_forward.1} parent=11 // pred_check_branch
        %195 = sbr.rel (%p193) target = $region28
      $region27: #{discriminator_forward.1} parent=11 // pred_region
        _
      $region28: #{discriminator_forward.1} parent=11 // pred_fallthru
        _
      // Predicated region
      $region29: #{discriminator_forward.1} parent=11 // pred_check
        %p196 = pneg %p143
      $region30: #{discriminator_forward.1} parent=11 // pred_check_branch
        %198 = sbr.rel (%p196) target = $region32
      $region31: #{discriminator_forward.1} parent=11 // pred_region
        _
      $region32: #{discriminator_forward.1} parent=11 // pred_fallthru
        _
    $region12: #{discriminator_forward.1} parent=5 // pred_fallthru
      _
    %p199 = scmp.lt.s32.totalorder %s12, 2
    // Predicated region
    $region33: #{discriminator_forward.1} parent=5 // pred_check
      %p200 = pneg %p199
    $region34: #{discriminator_forward.1} parent=5 // pred_check_branch
      %202 = sbr.rel (%p200) target = $region36
    $region35: #{discriminator_forward.1} parent=5 // pred_region
      // Predicated region
      $region37: #{discriminator_forward.1} parent=35 // pred_check
        %p203 = pneg %p32
      $region38: #{discriminator_forward.1} parent=35 // pred_check_branch
        %205 = sbr.rel (%p203) target = $region40
      $region39: #{discriminator_forward.1} parent=35 // pred_region
        %p206 = scmp.lt.s32.totalorder %s12, 1
        %s207 = scalar_select %p206, %s12, 1
        %s208 = smul.addr %s207, 8
        %s209 = smul.addr %s208, 4
        %s210 = scalar_lea.vmem %s0, %s209
      $region40: #{discriminator_forward.1} parent=35 // pred_fallthru
        _
    $region36: #{discriminator_forward.1} parent=5 // pred_fallthru
      _
    %p211 = scmp.le.s32.totalorder 1, %s12
    %p212 = scmp.lt.s32.totalorder %s12, 3
    %p213 = pnand %p211, %p212
    %p214 = pneg %p213
    // Predicated region
    $region41: #{discriminator_forward.1} parent=5 // pred_check
      _
    $region42: #{discriminator_forward.1} parent=5 // pred_check_branch
      %216 = sbr.rel (%p213) target = $region44
    $region43: #{discriminator_forward.1} parent=5 // pred_region
      %s217 = ssub.s32 %s12, 1
      %p218 = scmp.lt.s32.totalorder %s17, 1
      %s219 = scalar_select %p218, %s17, 1
      %s220 = smul.addr %s219, 8
      %s221 = smul.addr %s220, 4
      %s222 = scalar_lea.vmem %s0, %s221
      %p223 = pneg %p38
      %p224 = pneg %p35
      %p225 = pneg %p59
      %p226 = pneg %p56
      %p227 = pneg %p80
      %p228 = pneg %p77
      %p229 = pneg %p101
      %p230 = pneg %p98
      %p231 = pneg %p122
      %p232 = pneg %p119
      %p233 = pneg %p143
      %p234 = pneg %p140
      %p235 = pneg %p169
      %p236 = pneg %p166
      %p237 = scmp.lt.s32.totalorder %s17, 1
      %s238 = scalar_select %p237, %s17, 1
      %s239 = scalar_lea.vmem %s6, %s238
      %p240 = scmp.lt.s32.totalorder %s17, 1
      %s241 = scalar_select %p240, %s17, 1
      %s242 = smul.addr %s241, 8
      %s243 = smul.addr %s242, 4
      %s244 = scalar_lea.vmem %s0, %s243
      %p245 = scmp.lt.s32.totalorder %s17, 1
      %s246 = scalar_select %p245, %s17, 1
      %s247 = scalar_lea.vmem %s6, %s246
      %v249 = vld [vmem:[%s244] sm:$0xf]
      %v250 = vld [vmem:[%s244 + $0x4] sm:$0xf]
      %v251 = vld [vmem:[%s244 + $0x8] sm:$0xf]
      %v252 = vld [vmem:[%s244 + $0xc] sm:$0xf]
      %v253 = vld [vmem:[%s244 + $0x10] sm:$0xf]
      %v254 = vld [vmem:[%s244 + $0x14] sm:$0xf]
      %v255 = vld [vmem:[%s244 + $0x18] sm:$0xf]
      %v256 = vld [vmem:[%s244 + $0x1c] sm:$0xf]
      %v257 = vld [vmem:[%s1] sm:$0xf]
      %v258 = vld [vmem:[%s1 + $0x4] sm:$0xf]
      %v259 = vld [vmem:[%s1 + $0x8] sm:$0xf]
      %v260 = vld [vmem:[%s1 + $0xc] sm:$0xf]
      %v261 = vld [vmem:[%s1 + $0x10] sm:$0xf]
      %v262 = vld [vmem:[%s1 + $0x14] sm:$0xf]
      %v271 = vunpack.c.l.b16 %v249
      %v272 = vunpack.c.l.b16 %v250
      %v273 = vunpack.c.l.b16 %v251
      %v274 = vunpack.c.l.b16 %v252
      %v275 = vunpack.c.l.b16 %v253
      %v276 = vunpack.c.l.b16 %v254
      %v277 = vunpack.c.l.b16 %v255
      %v278 = vunpack.c.l.b16 %v256
      %v279 = vpack.c.b16 %v272, %v271
      %v280 = vpack.c.b16 %v274, %v273
      %v281 = vpack.c.b16 %v276, %v275
      %v282 = vpack.c.b16 %v278, %v277
      %v289 = vunpack.c.l.b16 %v257
      %v290 = vunpack.c.l.b16 %v258
      %v291 = vunpack.c.l.b16 %v259
      %v292 = vunpack.c.l.b16 %v260
      %v293 = vunpack.c.l.b16 %v261
      %v294 = vunpack.c.l.b16 %v262
      %v295 = vpack.c.b16 %v290, %v289
      %v296 = vpack.c.b16 %v292, %v291
      %v297 = vpack.c.b16 %v294, %v293
      %vm301 = vcmask 392192
      %v303 = vsel %vm301, %v279, 0
      %v306 = vsel %vm301, %v280, 0
      %v309 = vsel %vm301, %v281, 0
      %v312 = vsel %vm301, %v282, 0
      %314 = vmatpush.bf16.msra.mxu0 0
      %315 = vmatpush.bf16.msra.mxu0 0
      %316 = vmatpush.bf16.msra.mxu0 0
      %317 = vmatpush.bf16.msra.mxu0 0
      %318 = vmatpush.bf16.msra.mxu0 0
      %319 = vmatpush.bf16.msra.mxu0 %v297
      %320 = vmatpush.bf16.msra.mxu0 %v296
      %321 = vmatpush.bf16.msra.mxu0 %v295
      %322 = vmatmul.bf16.gmra.mxu0 %v303
      %v323 = vpop.f32.mrf.mxu0
      %v324 = vadd.f32 0.0, %v323
      %v325 = vpop.f32.mrf.mxu0
      %v326 = vadd.f32 0.0, %v325
      %327 = vmatmul.bf16.gmra.mxu0 %v306
      %v328 = vpop.f32.mrf.mxu0
      %v329 = vadd.f32 0.0, %v328
      %v330 = vpop.f32.mrf.mxu0
      %v331 = vadd.f32 0.0, %v330
      %332 = vmatmul.bf16.gmra.mxu0 %v309
      %v333 = vpop.f32.mrf.mxu0
      %v334 = vadd.f32 0.0, %v333
      %v335 = vpop.f32.mrf.mxu0
      %v336 = vadd.f32 0.0, %v335
      %337 = vmatmul.bf16.gmra.mxu0 %v312
      %v338 = vpop.f32.mrf.mxu0
      %v339 = vadd.f32 0.0, %v338
      %v340 = vpop.f32.mrf.mxu0
      %v341 = vadd.f32 0.0, %v340
      %342 = vdwg.mxu0
      %vm343 = vcmp.ge.f32.partialorder %v324, 0.0
      %vm344 = vcmp.ge.f32.partialorder %v326, 0.0
      %vm345 = vcmp.ge.f32.partialorder %v329, 0.0
      %vm346 = vcmp.ge.f32.partialorder %v331, 0.0
      %vm347 = vcmp.ge.f32.partialorder %v334, 0.0
      %vm348 = vcmp.ge.f32.partialorder %v336, 0.0
      %vm349 = vcmp.ge.f32.partialorder %v339, 0.0
      %vm350 = vcmp.ge.f32.partialorder %v341, 0.0
      %v351 = vmul.f32 %v324, 0.2
      %v352 = vmul.f32 %v326, 0.2
      %v353 = vmul.f32 %v329, 0.2
      %v354 = vmul.f32 %v331, 0.2
      %v355 = vmul.f32 %v334, 0.2
      %v356 = vmul.f32 %v336, 0.2
      %v357 = vmul.f32 %v339, 0.2
      %v358 = vmul.f32 %v341, 0.2
      %v359 = vsel %vm343, %v324, %v351
      %v360 = vsel %vm344, %v326, %v352
      %v361 = vsel %vm345, %v329, %v353
      %v362 = vsel %vm346, %v331, %v354
      %v363 = vsel %vm347, %v334, %v355
      %v364 = vsel %vm348, %v336, %v356
      %v365 = vsel %vm349, %v339, %v357
      %v366 = vsel %vm350, %v341, %v358
      %v367 = vpack.c.bf16 %v359, %v359
      %v368 = vpack.c.bf16 %v360, %v360
      %v369 = vpack.c.bf16 %v361, %v361
      %v370 = vpack.c.bf16 %v362, %v362
      %v371 = vpack.c.bf16 %v363, %v363
      %v372 = vpack.c.bf16 %v364, %v364
      %v373 = vpack.c.bf16 %v365, %v365
      %v374 = vpack.c.bf16 %v366, %v366
      %vm375 = vcmask 124928
      %vm376 = vsmask.f32 2304
      %vm377 = vmand %vm375, %vm376
      %v378 = vld [vmem:[#allocation2] sm:$0x7]
      %v379 = vsel %vm377, 0, %v378
      %380 = vst [vmem:[#allocation2] sm:$0x7] %v379
      %v381 = vld [vmem:[#allocation2 + $0x4] sm:$0x7]
      %v382 = vsel %vm377, 0, %v381
      %383 = vst [vmem:[#allocation2 + $0x4] sm:$0x7] %v382
      %v384 = vld [vmem:[#allocation2 + $0x8] sm:$0x7]
      %v385 = vsel %vm377, 0, %v384
      %386 = vst [vmem:[#allocation2 + $0x8] sm:$0x7] %v385
      %v387 = vld [vmem:[#allocation2 + $0xc] sm:$0x7]
      %v388 = vsel %vm377, 0, %v387
      %389 = vst [vmem:[#allocation2 + $0xc] sm:$0x7] %v388
      %v390 = vld [vmem:[#allocation2 + $0x10] sm:$0x7]
      %v391 = vsel %vm377, 0, %v390
      %392 = vst [vmem:[#allocation2 + $0x10] sm:$0x7] %v391
      %v393 = vld [vmem:[#allocation2 + $0x14] sm:$0x7]
      %v394 = vsel %vm377, 0, %v393
      %395 = vst [vmem:[#allocation2 + $0x14] sm:$0x7] %v394
      %v396 = vld [vmem:[#allocation2 + $0x18] sm:$0x7]
      %v397 = vsel %vm377, 0, %v396
      %398 = vst [vmem:[#allocation2 + $0x18] sm:$0x7] %v397
      %v399 = vld [vmem:[#allocation2 + $0x1c] sm:$0x7]
      %v400 = vsel %vm377, 0, %v399
      %401 = vst [vmem:[#allocation2 + $0x1c] sm:$0x7] %v400
      %v402 = vld [vmem:[#allocation2 + $0x20] sm:$0x7]
      %v403 = vsel %vm377, 0, %v402
      %404 = vst [vmem:[#allocation2 + $0x20] sm:$0x7] %v403
      %v405 = vld [vmem:[#allocation2 + $0x24] sm:$0x7]
      %v406 = vsel %vm377, 0, %v405
      %407 = vst [vmem:[#allocation2 + $0x24] sm:$0x7] %v406
      %v408 = vld [vmem:[#allocation2 + $0x28] sm:$0x7]
      %v409 = vsel %vm377, 0, %v408
      %410 = vst [vmem:[#allocation2 + $0x28] sm:$0x7] %v409
      %v411 = vld [vmem:[#allocation2 + $0x2c] sm:$0x7]
      %v412 = vsel %vm377, 0, %v411
      %413 = vst [vmem:[#allocation2 + $0x2c] sm:$0x7] %v412
      %v414 = vld [vmem:[#allocation2 + $0x30] sm:$0x7]
      %v415 = vsel %vm377, 0, %v414
      %416 = vst [vmem:[#allocation2 + $0x30] sm:$0x7] %v415
      %v417 = vld [vmem:[#allocation2 + $0x34] sm:$0x7]
      %v418 = vsel %vm377, 0, %v417
      %419 = vst [vmem:[#allocation2 + $0x34] sm:$0x7] %v418
      %v420 = vld [vmem:[#allocation2 + $0x38] sm:$0x7]
      %v421 = vsel %vm377, 0, %v420
      %422 = vst [vmem:[#allocation2 + $0x38] sm:$0x7] %v421
      %v423 = vld [vmem:[#allocation2 + $0x3c] sm:$0x7]
      %v424 = vsel %vm377, 0, %v423
      %425 = vst [vmem:[#allocation2 + $0x3c] sm:$0x7] %v424
      %v426 = vld [vmem:[#allocation2 + $0x40] sm:$0x7]
      %v427 = vsel %vm377, 0, %v426
      %428 = vst [vmem:[#allocation2 + $0x40] sm:$0x7] %v427
      %v429 = vld [vmem:[#allocation2 + $0x44] sm:$0x7]
      %v430 = vsel %vm377, 0, %v429
      %431 = vst [vmem:[#allocation2 + $0x44] sm:$0x7] %v430
      %v432 = vld [vmem:[#allocation2 + $0x48] sm:$0x7]
      %v433 = vsel %vm377, 0, %v432
      %434 = vst [vmem:[#allocation2 + $0x48] sm:$0x7] %v433
      %v435 = vld [vmem:[#allocation2 + $0x4c] sm:$0x7]
      %v436 = vsel %vm377, 0, %v435
      %437 = vst [vmem:[#allocation2 + $0x4c] sm:$0x7] %v436
      %v439 = vshrl.u32 %v367, 16
      %v441 = vrot.slane %v439, 7
      %v442 = vshll.u32 %v367, 16
      %v444 = vor.u32 %v441, %v442
      %s446 = scalar_lea.vmem [#allocation2], 4
      %vm447 = vsmask.f32 2306
      %vm448 = vmand %vm375, %vm447
      %v449 = vld [vmem:[%s446] sm:$0x7]
      %v450 = vsel %vm448, %v444, %v449
      %451 = vst [vmem:[%s446] sm:$0x7] %v450
      %v452 = vrot.slane %v439, 5
      %v453 = vrot.slane %v442, 6
      %v454 = vor.u32 %v452, %v453
      %v455 = vrot.slane %v454, 4
      %s457 = scalar_lea.vmem [#allocation2], 8
      %v458 = vld [vmem:[%s457] sm:$0x7]
      %v459 = vsel %vm448, %v455, %v458
      %460 = vst [vmem:[%s457] sm:$0x7] %v459
      %v462 = vshrl.u32 %v368, 16
      %v464 = vrot.slane %v462, 7
      %v465 = vshll.u32 %v368, 16
      %v467 = vor.u32 %v464, %v465
      %s469 = scalar_lea.vmem [#allocation2], 12
      %v470 = vld [vmem:[%s469] sm:$0x7]
      %v471 = vsel %vm448, %v467, %v470
      %472 = vst [vmem:[%s469] sm:$0x7] %v471
      %v473 = vrot.slane %v462, 5
      %v474 = vrot.slane %v465, 6
      %v475 = vor.u32 %v473, %v474
      %v476 = vrot.slane %v475, 4
      %s478 = scalar_lea.vmem [#allocation2], 16
      %v479 = vld [vmem:[%s478] sm:$0x7]
      %v480 = vsel %vm448, %v476, %v479
      %481 = vst [vmem:[%s478] sm:$0x7] %v480
      %s482 = scalar_lea.vmem [#allocation2], 24
      %vm483 = vcmask 123904
      %484 = vst.msk [vmem:[%s482] sm:$0x3] %vm483, %v369
      %v486 = vrot.slane %v369, 6
      %v487 = vrot.slane %v486, 4
      %s489 = scalar_lea.vmem [#allocation2], 28
      %490 = vst.msk [vmem:[%s489] sm:$0x3] %vm483, %v487
      %s491 = scalar_lea.vmem [#allocation2], 32
      %492 = vst.msk [vmem:[%s491] sm:$0x3] %vm483, %v370
      %v494 = vrot.slane %v370, 6
      %v495 = vrot.slane %v494, 4
      %s497 = scalar_lea.vmem [#allocation2], 36
      %498 = vst.msk [vmem:[%s497] sm:$0x3] %vm483, %v495
      %v500 = vshrl.u32 %v371, 16
      %v502 = vrot.slane %v500, 7
      %v503 = vshll.u32 %v371, 16
      %v505 = vor.u32 %v502, %v503
      %s507 = scalar_lea.vmem [#allocation2], 40
      %v508 = vld [vmem:[%s507] sm:$0x7]
      %v509 = vsel %vm448, %v505, %v508
      %510 = vst [vmem:[%s507] sm:$0x7] %v509
      %v511 = vrot.slane %v500, 5
      %v512 = vrot.slane %v503, 6
      %v513 = vor.u32 %v511, %v512
      %v514 = vrot.slane %v513, 4
      %s516 = scalar_lea.vmem [#allocation2], 44
      %v517 = vld [vmem:[%s516] sm:$0x7]
      %v518 = vsel %vm448, %v514, %v517
      %519 = vst [vmem:[%s516] sm:$0x7] %v518
      %v521 = vshrl.u32 %v372, 16
      %v523 = vrot.slane %v521, 7
      %v524 = vshll.u32 %v372, 16
      %v526 = vor.u32 %v523, %v524
      %s528 = scalar_lea.vmem [#allocation2], 48
      %v529 = vld [vmem:[%s528] sm:$0x7]
      %v530 = vsel %vm448, %v526, %v529
      %531 = vst [vmem:[%s528] sm:$0x7] %v530
      %v532 = vrot.slane %v521, 5
      %v533 = vrot.slane %v524, 6
      %v534 = vor.u32 %v532, %v533
      %v535 = vrot.slane %v534, 4
      %s537 = scalar_lea.vmem [#allocation2], 52
      %v538 = vld [vmem:[%s537] sm:$0x7]
      %v539 = vsel %vm448, %v535, %v538
      %540 = vst [vmem:[%s537] sm:$0x7] %v539
      %s541 = scalar_lea.vmem [#allocation2], 60
      %542 = vst.msk [vmem:[%s541] sm:$0x3] %vm483, %v373
      %v544 = vrot.slane %v373, 6
      %v545 = vrot.slane %v544, 4
      %s547 = scalar_lea.vmem [#allocation2], 64
      %548 = vst.msk [vmem:[%s547] sm:$0x3] %vm483, %v545
      %s549 = scalar_lea.vmem [#allocation2], 68
      %550 = vst.msk [vmem:[%s549] sm:$0x3] %vm483, %v374
      %v552 = vrot.slane %v374, 6
      %v553 = vrot.slane %v552, 4
      %s555 = scalar_lea.vmem [#allocation2], 72
      %556 = vst.msk [vmem:[%s555] sm:$0x3] %vm483, %v553
      %v557 = vld [vmem:[#allocation2] sm:$0x3]
      %v558 = vld [vmem:[#allocation2 + $0x4] sm:$0x3]
      %v559 = vld [vmem:[#allocation2 + $0x8] sm:$0x3]
      %v560 = vld [vmem:[#allocation2 + $0xc] sm:$0x3]
      %561 = vst.msk [vmem:[#allocation3] sm:$0x3] %vm483, %v557
      %v563 = vrot.slane %v558, 6
      %vm565 = vcmask 125954
      %566 = vst.msk [vmem:[#allocation3] sm:$0xc] %vm565, %v563
      %567 = vst.msk [vmem:[#allocation3 + $0x8] sm:$0x3] %vm483, %v559
      %v569 = vrot.slane %v560, 6
      %571 = vst.msk [vmem:[#allocation3 + $0x8] sm:$0xc] %vm565, %v569
      %s572 = scalar_lea.vmem [#allocation2], 20
      %v573 = vld [vmem:[%s572] sm:$0x3]
      %v574 = vld [vmem:[%s572 + $0x4] sm:$0x3]
      %v575 = vld [vmem:[%s572 + $0x8] sm:$0x3]
      %v576 = vld [vmem:[%s572 + $0xc] sm:$0x3]
      %578 = vrot.lane.b32.xlu0 %v573, 16
      %v579 = vpop.permute.xlu0 %578
      %vm581 = vcmask 255104
      %582 = vst.msk [vmem:[#allocation3] sm:$0x3] %vm581, %v579
      %v584 = vrot.slane %v574, 6
      %585 = vrot.lane.b32.xlu0 %v584, 16
      %v586 = vpop.permute.xlu0 %585
      %vm588 = vcmask 257154
      %589 = vst.msk [vmem:[#allocation3] sm:$0xc] %vm588, %v586
      %591 = vrot.lane.b32.xlu0 %v575, 16
      %v592 = vpop.permute.xlu0 %591
      %594 = vst.msk [vmem:[#allocation3 + $0x8] sm:$0x3] %vm581, %v592
      %v596 = vrot.slane %v576, 6
      %597 = vrot.lane.b32.xlu0 %v596, 16
      %v598 = vpop.permute.xlu0 %597
      %600 = vst.msk [vmem:[#allocation3 + $0x8] sm:$0xc] %vm588, %v598
      %v601 = vld [vmem:[#allocation2] sm:$0x7]
      %v602 = vld [vmem:[#allocation2 + $0x4] sm:$0x7]
      %v603 = vld [vmem:[#allocation2 + $0x8] sm:$0x7]
      %v604 = vld [vmem:[#allocation2 + $0xc] sm:$0x7]
      %v606 = vshrl.u32 %v601, 16
      %v608 = vrot.slane %v606, 4
      %v609 = vshll.u32 %v601, 16
      %v611 = vrot.slane %v609, 5
      %v612 = vor.u32 %v608, %v611
      %v613 = vrot.slane %v612, 4
      %614 = vrot.lane.b32.xlu0 %v613, 32
      %v615 = vpop.permute.xlu0 %614
      %vm617 = vcmask 386304
      %618 = vst.msk [vmem:[#allocation3] sm:$0x3] %vm617, %v615
      %v620 = vshrl.u32 %v602, 16
      %v622 = vrot.slane %v620, 6
      %v623 = vshll.u32 %v602, 16
      %v625 = vrot.slane %v623, 7
      %v626 = vor.u32 %v622, %v625
      %627 = vrot.lane.b32.xlu0 %v626, 32
      %v628 = vpop.permute.xlu0 %627
      %vm630 = vcmask 388354
      %631 = vst.msk [vmem:[#allocation3] sm:$0xc] %vm630, %v628
      %v633 = vshrl.u32 %v603, 16
      %v635 = vrot.slane %v633, 4
      %v636 = vshll.u32 %v603, 16
      %v638 = vrot.slane %v636, 5
      %v639 = vor.u32 %v635, %v638
      %v640 = vrot.slane %v639, 4
      %641 = vrot.lane.b32.xlu0 %v640, 32
      %v642 = vpop.permute.xlu0 %641
      %644 = vst.msk [vmem:[#allocation3 + $0x8] sm:$0x3] %vm617, %v642
      %v646 = vshrl.u32 %v604, 16
      %v648 = vrot.slane %v646, 6
      %v649 = vshll.u32 %v604, 16
      %v651 = vrot.slane %v649, 7
      %v652 = vor.u32 %v648, %v651
      %653 = vrot.lane.b32.xlu0 %v652, 32
      %v654 = vpop.permute.xlu0 %653
      %656 = vst.msk [vmem:[#allocation3 + $0x8] sm:$0xc] %vm630, %v654
      %v657 = vld [vmem:[%s572] sm:$0x7]
      %v658 = vld [vmem:[%s572 + $0x4] sm:$0x7]
      %v659 = vld [vmem:[%s572 + $0x8] sm:$0x7]
      %v660 = vld [vmem:[%s572 + $0xc] sm:$0x7]
      %v662 = vshrl.u32 %v657, 16
      %v664 = vrot.slane %v662, 4
      %v665 = vshll.u32 %v657, 16
      %v667 = vrot.slane %v665, 5
      %v668 = vor.u32 %v664, %v667
      %v669 = vrot.slane %v668, 4
      %670 = vrot.lane.b32.xlu0 %v669, 48
      %v671 = vpop.permute.xlu0 %670
      %vm673 = vcmask 517504
      %674 = vst.msk [vmem:[#allocation3] sm:$0x3] %vm673, %v671
      %v676 = vshrl.u32 %v658, 16
      %v678 = vrot.slane %v676, 6
      %v679 = vshll.u32 %v658, 16
      %v681 = vrot.slane %v679, 7
      %v682 = vor.u32 %v678, %v681
      %683 = vrot.lane.b32.xlu0 %v682, 48
      %v684 = vpop.permute.xlu0 %683
      %vm686 = vcmask 519554
      %687 = vst.msk [vmem:[#allocation3] sm:$0xc] %vm686, %v684
      %v689 = vshrl.u32 %v659, 16
      %v691 = vrot.slane %v689, 4
      %v692 = vshll.u32 %v659, 16
      %v694 = vrot.slane %v692, 5
      %v695 = vor.u32 %v691, %v694
      %v696 = vrot.slane %v695, 4
      %697 = vrot.lane.b32.xlu0 %v696, 48
      %v698 = vpop.permute.xlu0 %697
      %700 = vst.msk [vmem:[#allocation3 + $0x8] sm:$0x3] %vm673, %v698
      %v702 = vshrl.u32 %v660, 16
      %v704 = vrot.slane %v702, 6
      %v705 = vshll.u32 %v660, 16
      %v707 = vrot.slane %v705, 7
      %v708 = vor.u32 %v704, %v707
      %709 = vrot.lane.b32.xlu0 %v708, 48
      %v710 = vpop.permute.xlu0 %709
      %712 = vst.msk [vmem:[#allocation3 + $0x8] sm:$0xc] %vm686, %v710
      %v713 = vld [vmem:[%s507] sm:$0x3]
      %v714 = vld [vmem:[%s507 + $0x4] sm:$0x3]
      %v715 = vld [vmem:[%s507 + $0x8] sm:$0x3]
      %v716 = vld [vmem:[%s507 + $0xc] sm:$0x3]
      %718 = vrot.lane.b32.xlu0 %v713, 64
      %v719 = vpop.permute.xlu0 %718
      %vm721 = vcmask 648704
      %722 = vst.msk [vmem:[#allocation3] sm:$0x3] %vm721, %v719
      %v724 = vrot.slane %v714, 6
      %725 = vrot.lane.b32.xlu0 %v724, 64
      %v726 = vpop.permute.xlu0 %725
      %vm728 = vcmask 650754
      %729 = vst.msk [vmem:[#allocation3] sm:$0xc] %vm728, %v726
      %731 = vrot.lane.b32.xlu0 %v715, 64
      %v732 = vpop.permute.xlu0 %731
      %734 = vst.msk [vmem:[#allocation3 + $0x8] sm:$0x3] %vm721, %v732
      %v736 = vrot.slane %v716, 6
      %737 = vrot.lane.b32.xlu0 %v736, 64
      %v738 = vpop.permute.xlu0 %737
      %740 = vst.msk [vmem:[#allocation3 + $0x8] sm:$0xc] %vm728, %v738
      %v741 = vld [vmem:[%s541] sm:$0x3]
      %v742 = vld [vmem:[%s541 + $0x4] sm:$0x3]
      %v743 = vld [vmem:[%s541 + $0x8] sm:$0x3]
      %v744 = vld [vmem:[%s541 + $0xc] sm:$0x3]
      %746 = vrot.lane.b32.xlu0 %v741, 80
      %v747 = vpop.permute.xlu0 %746
      %vm749 = vcmask 779904
      %750 = vst.msk [vmem:[#allocation3] sm:$0x3] %vm749, %v747
      %v752 = vrot.slane %v742, 6
      %753 = vrot.lane.b32.xlu0 %v752, 80
      %v754 = vpop.permute.xlu0 %753
      %vm756 = vcmask 781954
      %757 = vst.msk [vmem:[#allocation3] sm:$0xc] %vm756, %v754
      %759 = vrot.lane.b32.xlu0 %v743, 80
      %v760 = vpop.permute.xlu0 %759
      %762 = vst.msk [vmem:[#allocation3 + $0x8] sm:$0x3] %vm749, %v760
      %v764 = vrot.slane %v744, 6
      %765 = vrot.lane.b32.xlu0 %v764, 80
      %v766 = vpop.permute.xlu0 %765
      %768 = vst.msk [vmem:[#allocation3 + $0x8] sm:$0xc] %vm756, %v766
      %v769 = vld [vmem:[%s507] sm:$0x7]
      %v770 = vld [vmem:[%s507 + $0x4] sm:$0x7]
      %v771 = vld [vmem:[%s507 + $0x8] sm:$0x7]
      %v772 = vld [vmem:[%s507 + $0xc] sm:$0x7]
      %v774 = vshrl.u32 %v769, 16
      %v776 = vrot.slane %v774, 4
      %v777 = vshll.u32 %v769, 16
      %v779 = vrot.slane %v777, 5
      %v780 = vor.u32 %v776, %v779
      %v781 = vrot.slane %v780, 4
      %782 = vrot.lane.b32.xlu0 %v781, 96
      %v783 = vpop.permute.xlu0 %782
      %vm785 = vcmask 911104
      %786 = vst.msk [vmem:[#allocation3] sm:$0x3] %vm785, %v783
      %v788 = vshrl.u32 %v770, 16
      %v790 = vrot.slane %v788, 6
      %v791 = vshll.u32 %v770, 16
      %v793 = vrot.slane %v791, 7
      %v794 = vor.u32 %v790, %v793
      %795 = vrot.lane.b32.xlu0 %v794, 96
      %v796 = vpop.permute.xlu0 %795
      %vm798 = vcmask 913154
      %799 = vst.msk [vmem:[#allocation3] sm:$0xc] %vm798, %v796
      %v801 = vshrl.u32 %v771, 16
      %v803 = vrot.slane %v801, 4
      %v804 = vshll.u32 %v771, 16
      %v806 = vrot.slane %v804, 5
      %v807 = vor.u32 %v803, %v806
      %v808 = vrot.slane %v807, 4
      %809 = vrot.lane.b32.xlu0 %v808, 96
      %v810 = vpop.permute.xlu0 %809
      %812 = vst.msk [vmem:[#allocation3 + $0x8] sm:$0x3] %vm785, %v810
      %v814 = vshrl.u32 %v772, 16
      %v816 = vrot.slane %v814, 6
      %v817 = vshll.u32 %v772, 16
      %v819 = vrot.slane %v817, 7
      %v820 = vor.u32 %v816, %v819
      %821 = vrot.lane.b32.xlu0 %v820, 96
      %v822 = vpop.permute.xlu0 %821
      %824 = vst.msk [vmem:[#allocation3 + $0x8] sm:$0xc] %vm798, %v822
      %v825 = vld [vmem:[%s541] sm:$0x7]
      %v826 = vld [vmem:[%s541 + $0x4] sm:$0x7]
      %v827 = vld [vmem:[%s541 + $0x8] sm:$0x7]
      %v828 = vld [vmem:[%s541 + $0xc] sm:$0x7]
      %v830 = vshrl.u32 %v825, 16
      %v832 = vrot.slane %v830, 4
      %v833 = vshll.u32 %v825, 16
      %v835 = vrot.slane %v833, 5
      %v836 = vor.u32 %v832, %v835
      %v837 = vrot.slane %v836, 4
      %838 = vrot.lane.b32.xlu0 %v837, 112
      %v839 = vpop.permute.xlu0 %838
      %vm841 = vcmask 1042304
      %842 = vst.msk [vmem:[#allocation3] sm:$0x3] %vm841, %v839
      %v844 = vshrl.u32 %v826, 16
      %v846 = vrot.slane %v844, 6
      %v847 = vshll.u32 %v826, 16
      %v849 = vrot.slane %v847, 7
      %v850 = vor.u32 %v846, %v849
      %851 = vrot.lane.b32.xlu0 %v850, 112
      %v852 = vpop.permute.xlu0 %851
      %vm854 = vcmask 1044354
      %855 = vst.msk [vmem:[#allocation3] sm:$0xc] %vm854, %v852
      %v857 = vshrl.u32 %v827, 16
      %v859 = vrot.slane %v857, 4
      %v860 = vshll.u32 %v827, 16
      %v862 = vrot.slane %v860, 5
      %v863 = vor.u32 %v859, %v862
      %v864 = vrot.slane %v863, 4
      %865 = vrot.lane.b32.xlu0 %v864, 112
      %v866 = vpop.permute.xlu0 %865
      %868 = vst.msk [vmem:[#allocation3 + $0x8] sm:$0x3] %vm841, %v866
      %v870 = vshrl.u32 %v828, 16
      %v872 = vrot.slane %v870, 6
      %v873 = vshll.u32 %v828, 16
      %v875 = vrot.slane %v873, 7
      %v876 = vor.u32 %v872, %v875
      %877 = vrot.lane.b32.xlu0 %v876, 112
      %v878 = vpop.permute.xlu0 %877
      %880 = vst.msk [vmem:[#allocation3 + $0x8] sm:$0xc] %vm854, %v878
      %v881 = vld [vmem:[%s446] sm:$0x3]
      %v882 = vld [vmem:[%s446 + $0x4] sm:$0x3]
      %v883 = vld [vmem:[%s446 + $0x8] sm:$0x3]
      %v884 = vld [vmem:[%s446 + $0xc] sm:$0x3]
      %885 = vst.msk [vmem:[#allocation3 + $0x4] sm:$0x3] %vm483, %v881
      %v887 = vrot.slane %v882, 6
      %889 = vst.msk [vmem:[#allocation3 + $0x4] sm:$0xc] %vm565, %v887
      %890 = vst.msk [vmem:[#allocation3 + $0xc] sm:$0x3] %vm483, %v883
      %v892 = vrot.slane %v884, 6
      %894 = vst.msk [vmem:[#allocation3 + $0xc] sm:$0xc] %vm565, %v892
      %v895 = vld [vmem:[%s482] sm:$0x3]
      %v896 = vld [vmem:[%s482 + $0x4] sm:$0x3]
      %v897 = vld [vmem:[%s482 + $0x8] sm:$0x3]
      %v898 = vld [vmem:[%s482 + $0xc] sm:$0x3]
      %900 = vrot.lane.b32.xlu0 %v895, 16
      %v901 = vpop.permute.xlu0 %900
      %903 = vst.msk [vmem:[#allocation3 + $0x4] sm:$0x3] %vm581, %v901
      %v905 = vrot.slane %v896, 6
      %906 = vrot.lane.b32.xlu0 %v905, 16
      %v907 = vpop.permute.xlu0 %906
      %909 = vst.msk [vmem:[#allocation3 + $0x4] sm:$0xc] %vm588, %v907
      %911 = vrot.lane.b32.xlu0 %v897, 16
      %v912 = vpop.permute.xlu0 %911
      %914 = vst.msk [vmem:[#allocation3 + $0xc] sm:$0x3] %vm581, %v912
      %v916 = vrot.slane %v898, 6
      %917 = vrot.lane.b32.xlu0 %v916, 16
      %v918 = vpop.permute.xlu0 %917
      %920 = vst.msk [vmem:[#allocation3 + $0xc] sm:$0xc] %vm588, %v918
      %v921 = vld [vmem:[%s446] sm:$0x7]
      %v922 = vld [vmem:[%s446 + $0x4] sm:$0x7]
      %v923 = vld [vmem:[%s446 + $0x8] sm:$0x7]
      %v924 = vld [vmem:[%s446 + $0xc] sm:$0x7]
      %v926 = vshrl.u32 %v921, 16
      %v928 = vrot.slane %v926, 4
      %v929 = vshll.u32 %v921, 16
      %v931 = vrot.slane %v929, 5
      %v932 = vor.u32 %v928, %v931
      %v933 = vrot.slane %v932, 4
      %934 = vrot.lane.b32.xlu0 %v933, 32
      %v935 = vpop.permute.xlu0 %934
      %937 = vst.msk [vmem:[#allocation3 + $0x4] sm:$0x3] %vm617, %v935
      %v939 = vshrl.u32 %v922, 16
      %v941 = vrot.slane %v939, 6
      %v942 = vshll.u32 %v922, 16
      %v944 = vrot.slane %v942, 7
      %v945 = vor.u32 %v941, %v944
      %946 = vrot.lane.b32.xlu0 %v945, 32
      %v947 = vpop.permute.xlu0 %946
      %949 = vst.msk [vmem:[#allocation3 + $0x4] sm:$0xc] %vm630, %v947
      %v951 = vshrl.u32 %v923, 16
      %v953 = vrot.slane %v951, 4
      %v954 = vshll.u32 %v923, 16
      %v956 = vrot.slane %v954, 5
      %v957 = vor.u32 %v953, %v956
      %v958 = vrot.slane %v957, 4
      %959 = vrot.lane.b32.xlu0 %v958, 32
      %v960 = vpop.permute.xlu0 %959
      %962 = vst.msk [vmem:[#allocation3 + $0xc] sm:$0x3] %vm617, %v960
      %v964 = vshrl.u32 %v924, 16
      %v966 = vrot.slane %v964, 6
      %v967 = vshll.u32 %v924, 16
      %v969 = vrot.slane %v967, 7
      %v970 = vor.u32 %v966, %v969
      %971 = vrot.lane.b32.xlu0 %v970, 32
      %v972 = vpop.permute.xlu0 %971
      %974 = vst.msk [vmem:[#allocation3 + $0xc] sm:$0xc] %vm630, %v972
      %v975 = vld [vmem:[%s482] sm:$0x7]
      %v976 = vld [vmem:[%s482 + $0x4] sm:$0x7]
      %v977 = vld [vmem:[%s482 + $0x8] sm:$0x7]
      %v978 = vld [vmem:[%s482 + $0xc] sm:$0x7]
      %v980 = vshrl.u32 %v975, 16
      %v982 = vrot.slane %v980, 4
      %v983 = vshll.u32 %v975, 16
      %v985 = vrot.slane %v983, 5
      %v986 = vor.u32 %v982, %v985
      %v987 = vrot.slane %v986, 4
      %988 = vrot.lane.b32.xlu0 %v987, 48
      %v989 = vpop.permute.xlu0 %988
      %991 = vst.msk [vmem:[#allocation3 + $0x4] sm:$0x3] %vm673, %v989
      %v993 = vshrl.u32 %v976, 16
      %v995 = vrot.slane %v993, 6
      %v996 = vshll.u32 %v976, 16
      %v998 = vrot.slane %v996, 7
      %v999 = vor.u32 %v995, %v998
      %1000 = vrot.lane.b32.xlu0 %v999, 48
      %v1001 = vpop.permute.xlu0 %1000
      %1003 = vst.msk [vmem:[#allocation3 + $0x4] sm:$0xc] %vm686, %v1001
      %v1005 = vshrl.u32 %v977, 16
      %v1007 = vrot.slane %v1005, 4
      %v1008 = vshll.u32 %v977, 16
      %v1010 = vrot.slane %v1008, 5
      %v1011 = vor.u32 %v1007, %v1010
      %v1012 = vrot.slane %v1011, 4
      %1013 = vrot.lane.b32.xlu0 %v1012, 48
      %v1014 = vpop.permute.xlu0 %1013
      %1016 = vst.msk [vmem:[#allocation3 + $0xc] sm:$0x3] %vm673, %v1014
      %v1018 = vshrl.u32 %v978, 16
      %v1020 = vrot.slane %v1018, 6
      %v1021 = vshll.u32 %v978, 16
      %v1023 = vrot.slane %v1021, 7
      %v1024 = vor.u32 %v1020, %v1023
      %1025 = vrot.lane.b32.xlu0 %v1024, 48
      %v1026 = vpop.permute.xlu0 %1025
      %1028 = vst.msk [vmem:[#allocation3 + $0xc] sm:$0xc] %vm686, %v1026
      %v1029 = vld [vmem:[%s516] sm:$0x3]
      %v1030 = vld [vmem:[%s516 + $0x4] sm:$0x3]
      %v1031 = vld [vmem:[%s516 + $0x8] sm:$0x3]
      %v1032 = vld [vmem:[%s516 + $0xc] sm:$0x3]
      %1034 = vrot.lane.b32.xlu0 %v1029, 64
      %v1035 = vpop.permute.xlu0 %1034
      %1037 = vst.msk [vmem:[#allocation3 + $0x4] sm:$0x3] %vm721, %v1035
      %v1039 = vrot.slane %v1030, 6
      %1040 = vrot.lane.b32.xlu0 %v1039, 64
      %v1041 = vpop.permute.xlu0 %1040
      %1043 = vst.msk [vmem:[#allocation3 + $0x4] sm:$0xc] %vm728, %v1041
      %1045 = vrot.lane.b32.xlu0 %v1031, 64
      %v1046 = vpop.permute.xlu0 %1045
      %1048 = vst.msk [vmem:[#allocation3 + $0xc] sm:$0x3] %vm721, %v1046
      %v1050 = vrot.slane %v1032, 6
      %1051 = vrot.lane.b32.xlu0 %v1050, 64
      %v1052 = vpop.permute.xlu0 %1051
      %1054 = vst.msk [vmem:[#allocation3 + $0xc] sm:$0xc] %vm728, %v1052
      %v1055 = vld [vmem:[%s547] sm:$0x3]
      %v1056 = vld [vmem:[%s547 + $0x4] sm:$0x3]
      %v1057 = vld [vmem:[%s547 + $0x8] sm:$0x3]
      %v1058 = vld [vmem:[%s547 + $0xc] sm:$0x3]
      %1060 = vrot.lane.b32.xlu0 %v1055, 80
      %v1061 = vpop.permute.xlu0 %1060
      %1063 = vst.msk [vmem:[#allocation3 + $0x4] sm:$0x3] %vm749, %v1061
      %v1065 = vrot.slane %v1056, 6
      %1066 = vrot.lane.b32.xlu0 %v1065, 80
      %v1067 = vpop.permute.xlu0 %1066
      %1069 = vst.msk [vmem:[#allocation3 + $0x4] sm:$0xc] %vm756, %v1067
      %1071 = vrot.lane.b32.xlu0 %v1057, 80
      %v1072 = vpop.permute.xlu0 %1071
      %1074 = vst.msk [vmem:[#allocation3 + $0xc] sm:$0x3] %vm749, %v1072
      %v1076 = vrot.slane %v1058, 6
      %1077 = vrot.lane.b32.xlu0 %v1076, 80
      %v1078 = vpop.permute.xlu0 %1077
      %1080 = vst.msk [vmem:[#allocation3 + $0xc] sm:$0xc] %vm756, %v1078
      %v1081 = vld [vmem:[%s516] sm:$0x7]
      %v1082 = vld [vmem:[%s516 + $0x4] sm:$0x7]
      %v1083 = vld [vmem:[%s516 + $0x8] sm:$0x7]
      %v1084 = vld [vmem:[%s516 + $0xc] sm:$0x7]
      %v1086 = vshrl.u32 %v1081, 16
      %v1088 = vrot.slane %v1086, 4
      %v1089 = vshll.u32 %v1081, 16
      %v1091 = vrot.slane %v1089, 5
      %v1092 = vor.u32 %v1088, %v1091
      %v1093 = vrot.slane %v1092, 4
      %1094 = vrot.lane.b32.xlu0 %v1093, 96
      %v1095 = vpop.permute.xlu0 %1094
      %1097 = vst.msk [vmem:[#allocation3 + $0x4] sm:$0x3] %vm785, %v1095
      %v1099 = vshrl.u32 %v1082, 16
      %v1101 = vrot.slane %v1099, 6
      %v1102 = vshll.u32 %v1082, 16
      %v1104 = vrot.slane %v1102, 7
      %v1105 = vor.u32 %v1101, %v1104
      %1106 = vrot.lane.b32.xlu0 %v1105, 96
      %v1107 = vpop.permute.xlu0 %1106
      %1109 = vst.msk [vmem:[#allocation3 + $0x4] sm:$0xc] %vm798, %v1107
      %v1111 = vshrl.u32 %v1083, 16
      %v1113 = vrot.slane %v1111, 4
      %v1114 = vshll.u32 %v1083, 16
      %v1116 = vrot.slane %v1114, 5
      %v1117 = vor.u32 %v1113, %v1116
      %v1118 = vrot.slane %v1117, 4
      %1119 = vrot.lane.b32.xlu0 %v1118, 96
      %v1120 = vpop.permute.xlu0 %1119
      %1122 = vst.msk [vmem:[#allocation3 + $0xc] sm:$0x3] %vm785, %v1120
      %v1124 = vshrl.u32 %v1084, 16
      %v1126 = vrot.slane %v1124, 6
      %v1127 = vshll.u32 %v1084, 16
      %v1129 = vrot.slane %v1127, 7
      %v1130 = vor.u32 %v1126, %v1129
      %1131 = vrot.lane.b32.xlu0 %v1130, 96
      %v1132 = vpop.permute.xlu0 %1131
      %1134 = vst.msk [vmem:[#allocation3 + $0xc] sm:$0xc] %vm798, %v1132
      %v1135 = vld [vmem:[%s547] sm:$0x7]
      %v1136 = vld [vmem:[%s547 + $0x4] sm:$0x7]
      %v1137 = vld [vmem:[%s547 + $0x8] sm:$0x7]
      %v1138 = vld [vmem:[%s547 + $0xc] sm:$0x7]
      %v1140 = vshrl.u32 %v1135, 16
      %v1142 = vrot.slane %v1140, 4
      %v1143 = vshll.u32 %v1135, 16
      %v1145 = vrot.slane %v1143, 5
      %v1146 = vor.u32 %v1142, %v1145
      %v1147 = vrot.slane %v1146, 4
      %1148 = vrot.lane.b32.xlu0 %v1147, 112
      %v1149 = vpop.permute.xlu0 %1148
      %1151 = vst.msk [vmem:[#allocation3 + $0x4] sm:$0x3] %vm841, %v1149
      %v1153 = vshrl.u32 %v1136, 16
      %v1155 = vrot.slane %v1153, 6
      %v1156 = vshll.u32 %v1136, 16
      %v1158 = vrot.slane %v1156, 7
      %v1159 = vor.u32 %v1155, %v1158
      %1160 = vrot.lane.b32.xlu0 %v1159, 112
      %v1161 = vpop.permute.xlu0 %1160
      %1163 = vst.msk [vmem:[#allocation3 + $0x4] sm:$0xc] %vm854, %v1161
      %v1165 = vshrl.u32 %v1137, 16
      %v1167 = vrot.slane %v1165, 4
      %v1168 = vshll.u32 %v1137, 16
      %v1170 = vrot.slane %v1168, 5
      %v1171 = vor.u32 %v1167, %v1170
      %v1172 = vrot.slane %v1171, 4
      %1173 = vrot.lane.b32.xlu0 %v1172, 112
      %v1174 = vpop.permute.xlu0 %1173
      %1176 = vst.msk [vmem:[#allocation3 + $0xc] sm:$0x3] %vm841, %v1174
      %v1178 = vshrl.u32 %v1138, 16
      %v1180 = vrot.slane %v1178, 6
      %v1181 = vshll.u32 %v1138, 16
      %v1183 = vrot.slane %v1181, 7
      %v1184 = vor.u32 %v1180, %v1183
      %1185 = vrot.lane.b32.xlu0 %v1184, 112
      %v1186 = vpop.permute.xlu0 %1185
      %1188 = vst.msk [vmem:[#allocation3 + $0xc] sm:$0xc] %vm854, %v1186
      %v1189 = vld [vmem:[#allocation3] sm:$0xff]
      %v1190 = vld [vmem:[#allocation3 + $0x8] sm:$0xff]
      %v1191 = vld [vmem:[%s2] sm:$0xf]
      %v1192 = vld [vmem:[%s2 + $0x4] sm:$0xf]
      %v1193 = vld [vmem:[%s2 + $0x8] sm:$0xf]
      %v1194 = vld [vmem:[%s2 + $0xc] sm:$0xf]
      %v1195 = vld [vmem:[%s2 + $0x10] sm:$0xf]
      %v1196 = vld [vmem:[%s2 + $0x14] sm:$0xf]
      %v1197 = vld [vmem:[%s2 + $0x18] sm:$0xf]
      %v1198 = vld [vmem:[%s2 + $0x1c] sm:$0xf]
      %v1199 = vld [vmem:[%s2 + $0x20] sm:$0xf]
      %v1200 = vld [vmem:[%s2 + $0x24] sm:$0xf]
      %v1201 = vld [vmem:[%s2 + $0x28] sm:$0xf]
      %v1202 = vld [vmem:[%s2 + $0x2c] sm:$0xf]
      %v1203 = vld [vmem:[%s2 + $0x30] sm:$0xf]
      %v1204 = vld [vmem:[%s2 + $0x34] sm:$0xf]
      %v1205 = vld [vmem:[%s2 + $0x38] sm:$0xf]
      %v1206 = vld [vmem:[%s2 + $0x3c] sm:$0xf]
      %v1207 = vld [vmem:[%s2 + $0x40] sm:$0xf]
      %v1208 = vld [vmem:[%s2 + $0x44] sm:$0xf]
      %v1209 = vld [vmem:[%s2 + $0x48] sm:$0xf]
      %v1210 = vld [vmem:[%s2 + $0x4c] sm:$0xf]
      %v1211 = vld [vmem:[%s2 + $0x50] sm:$0xf]
      %v1212 = vld [vmem:[%s2 + $0x54] sm:$0xf]
      %v1213 = vld [vmem:[%s2 + $0x58] sm:$0xf]
      %v1214 = vld [vmem:[%s2 + $0x5c] sm:$0xf]
      %v1215 = vld [vmem:[%s2 + $0x60] sm:$0xf]
      %v1216 = vld [vmem:[%s2 + $0x64] sm:$0xf]
      %v1217 = vld [vmem:[%s2 + $0x68] sm:$0xf]
      %v1218 = vld [vmem:[%s2 + $0x6c] sm:$0xf]
      %v1219 = vld [vmem:[%s2 + $0x70] sm:$0xf]
      %v1220 = vld [vmem:[%s2 + $0x74] sm:$0xf]
      %v1221 = vld [vmem:[%s2 + $0x78] sm:$0xf]
      %v1222 = vld [vmem:[%s2 + $0x7c] sm:$0xf]
      %v1225 = vunpack.c.l.b16 %v1189
      %v1226 = vunpack.c.h.b16 %v1189
      %v1227 = vunpack.c.l.b16 %v1190
      %v1228 = vunpack.c.h.b16 %v1190
      %v1229 = vpack.c.b16 %v1227, %v1225
      %v1230 = vpack.c.b16 %v1228, %v1226
      %v1265 = vunpack.c.l.b16 %v1191
      %v1266 = vunpack.c.l.b16 %v1192
      %v1267 = vunpack.c.l.b16 %v1193
      %v1268 = vunpack.c.l.b16 %v1194
      %v1269 = vunpack.c.l.b16 %v1195
      %v1270 = vunpack.c.l.b16 %v1196
      %v1271 = vunpack.c.l.b16 %v1197
      %v1272 = vunpack.c.l.b16 %v1198
      %v1273 = vunpack.c.l.b16 %v1199
      %v1274 = vunpack.c.l.b16 %v1200
      %v1275 = vunpack.c.l.b16 %v1201
      %v1276 = vunpack.c.l.b16 %v1202
      %v1277 = vunpack.c.l.b16 %v1203
      %v1278 = vunpack.c.l.b16 %v1204
      %v1279 = vunpack.c.l.b16 %v1205
      %v1280 = vunpack.c.l.b16 %v1206
      %v1281 = vunpack.c.l.b16 %v1207
      %v1282 = vunpack.c.l.b16 %v1208
      %v1283 = vunpack.c.l.b16 %v1209
      %v1284 = vunpack.c.l.b16 %v1210
      %v1285 = vunpack.c.l.b16 %v1211
      %v1286 = vunpack.c.l.b16 %v1212
      %v1287 = vunpack.c.l.b16 %v1213
      %v1288 = vunpack.c.l.b16 %v1214
      %v1289 = vunpack.c.l.b16 %v1215
      %v1290 = vunpack.c.l.b16 %v1216
      %v1291 = vunpack.c.l.b16 %v1217
      %v1292 = vunpack.c.l.b16 %v1218
      %v1293 = vunpack.c.l.b16 %v1219
      %v1294 = vunpack.c.l.b16 %v1220
      %v1295 = vunpack.c.l.b16 %v1221
      %v1296 = vunpack.c.l.b16 %v1222
      %v1297 = vpack.c.b16 %v1266, %v1265
      %v1298 = vpack.c.b16 %v1268, %v1267
      %v1299 = vpack.c.b16 %v1270, %v1269
      %v1300 = vpack.c.b16 %v1272, %v1271
      %v1301 = vpack.c.b16 %v1274, %v1273
      %v1302 = vpack.c.b16 %v1276, %v1275
      %v1303 = vpack.c.b16 %v1278, %v1277
      %v1304 = vpack.c.b16 %v1280, %v1279
      %v1305 = vpack.c.b16 %v1282, %v1281
      %v1306 = vpack.c.b16 %v1284, %v1283
      %v1307 = vpack.c.b16 %v1286, %v1285
      %v1308 = vpack.c.b16 %v1288, %v1287
      %v1309 = vpack.c.b16 %v1290, %v1289
      %v1310 = vpack.c.b16 %v1292, %v1291
      %v1311 = vpack.c.b16 %v1294, %v1293
      %v1312 = vpack.c.b16 %v1296, %v1295
      %1329 = vmatpush.bf16.msra.mxu0 %v1304
      %1330 = vmatpush.bf16.msra.mxu0 %v1303
      %1331 = vmatpush.bf16.msra.mxu0 %v1302
      %1332 = vmatpush.bf16.msra.mxu0 %v1301
      %1333 = vmatpush.bf16.msra.mxu0 %v1300
      %1334 = vmatpush.bf16.msra.mxu0 %v1299
      %1335 = vmatpush.bf16.msra.mxu0 %v1298
      %1336 = vmatpush.bf16.msra.mxu0 %v1297
      %1337 = vmatmul.bf16.gmra.mxu0 %v1229
      %v1338 = vpop.f32.mrf.mxu0
      %v1339 = vadd.f32 0.0, %v1338
      %v1340 = vpop.f32.mrf.mxu0
      %v1341 = vadd.f32 0.0, %v1340
      %1342 = vdwg.mxu0
      %1343 = vmatpush.bf16.msra.mxu0 %v1312
      %1344 = vmatpush.bf16.msra.mxu0 %v1311
      %1345 = vmatpush.bf16.msra.mxu0 %v1310
      %1346 = vmatpush.bf16.msra.mxu0 %v1309
      %1347 = vmatpush.bf16.msra.mxu0 %v1308
      %1348 = vmatpush.bf16.msra.mxu0 %v1307
      %1349 = vmatpush.bf16.msra.mxu0 %v1306
      %1350 = vmatpush.bf16.msra.mxu0 %v1305
      %1351 = vmatmul.bf16.gmra.mxu0 %v1230
      %v1352 = vpop.f32.mrf.mxu0
      %v1353 = vadd.f32 %v1339, %v1352
      %v1354 = vpop.f32.mrf.mxu0
      %v1355 = vadd.f32 %v1341, %v1354
      %1356 = vdwg.mxu0
      %v1357 = vld [vmem:[%s3] sm:$0x1]
      %v1358 = vld [vmem:[%s4] sm:$0x1]
      %v1359 = vld [vmem:[%s5] sm:$0xff]
      %v1360 = vld [vmem:[%s5 + $0x8] sm:$0xff]
      %vm1361 = vcmask 261120
      %v1362 = vsel %vm1361, %v1353, 0.0
      %v1363 = vsel %vm1361, %v1355, 0.0
      %v1364 = vadd.f32 %v1362, %v1363
      %v1365 = vrot.slane %v1364, 4
      %v1366 = vadd.f32 %v1364, %v1365
      %v1367 = vrot.slane %v1366, 2
      %v1368 = vadd.f32 %v1366, %v1367
      %v1369 = vrot.slane %v1368, 1
      %v1370 = vadd.f32 %v1368, %v1369
      %v1371 = vrcp.pop 16.0
      %v1372 = vmul.f32 16.0, %v1371
      %v1373 = vsub.f32 1.0, %v1372
      %v1374 = vmul.f32 %v1371, %v1373
      %v1375 = vadd.f32 %v1371, %v1374
      %vm1376 = vweird.f32 %v1371
      %v1377 = vsel %vm1376, %v1371, %v1375
      %v1378 = vmul.f32 %v1370, %v1377
      %v1379 = vsub.f32 %v1353, %v1378
      %v1380 = vsub.f32 %v1355, %v1378
      %v1381 = vmul.f32 %v1379, %v1379
      %v1382 = vmul.f32 %v1380, %v1380
      %v1383 = vsel %vm1361, %v1381, 0.0
      %v1384 = vsel %vm1361, %v1382, 0.0
      %v1385 = vadd.f32 %v1383, %v1384
      %v1386 = vrot.slane %v1385, 4
      %v1387 = vadd.f32 %v1385, %v1386
      %v1388 = vrot.slane %v1387, 2
      %v1389 = vadd.f32 %v1387, %v1388
      %v1390 = vrot.slane %v1389, 1
      %v1391 = vadd.f32 %v1389, %v1390
      %v1392 = vmul.f32 %v1391, %v1377
      %v1393 = vadd.f32 %v1392, 1e-05
      %v1394 = vrsqrt.pop %v1393
      %v1395 = vmul.f32 %v1394, %v1393
      %v1396 = vmul.f32 %v1395, %v1394
      %v1397 = vmul.f32 0.5, %v1396
      %v1398 = vsub.f32 1.5, %v1397
      %v1399 = vmul.f32 %v1394, %v1398
      %vm1400 = vweird.f32 %v1393
      %vm1401 = vweird.f32 %v1394
      %vm1402 = vmor %vm1400, %vm1401
      %v1403 = vsel %vm1402, %v1394, %v1399
      %v1404 = vmul.f32 %v1379, %v1403
      %v1405 = vmul.f32 %v1380, %v1403
      %v1407 = vperm.slane %v1357, 0
      %v1409 = vmul.f32 %v1404, %v1407
      %v1410 = vmul.f32 %v1405, %v1407
      %v1412 = vperm.slane %v1358, 0
      %v1414 = vadd.f32 %v1409, %v1412
      %v1415 = vadd.f32 %v1410, %v1412
      %vm1416 = vcmp.ge.f32.partialorder %v1414, 0.0
      %vm1417 = vcmp.ge.f32.partialorder %v1415, 0.0
      %v1418 = vmul.f32 %v1414, 0.2
      %v1419 = vmul.f32 %v1415, 0.2
      %v1420 = vsel %vm1416, %v1414, %v1418
      %v1421 = vsel %vm1417, %v1415, %v1419
      %v1422 = vmul.f32 %v1420, %v1359
      %v1423 = vmul.f32 %v1421, %v1360
      %v1424 = vsel %vm1361, %v1422, 0.0
      %1425 = vadd.xlane.f32.xlu0 %v1424
      %v1426 = vpop.xlane.xlu0 %1425
      %v1427 = vsel %vm1361, %v1423, 0.0
      %1428 = vadd.xlane.f32.xlu0 %v1427
      %v1429 = vpop.xlane.xlu0 %1428
      %v1430 = vadd.f32 %v1426, %v1429
      %v1431 = vrot.slane %v1430, 4
      %v1432 = vadd.f32 %v1430, %v1431
      %v1433 = vrot.slane %v1432, 2
      %v1434 = vadd.f32 %v1432, %v1433
      %v1435 = vrot.slane %v1434, 1
      %v1436 = vadd.f32 %v1434, %v1435
      %vm1437 = vcmask 0
      %1438 = vst.msk [vmem:[%s247] sm:$0x1] %vm1437, %v1436
      %p1439 = scmp.lt.s32.totalorder %s17, 1
      %s1440 = scalar_select %p1439, %s17, 1
      %s1441 = scalar_lea.vmem %s6, %s1440
      // Predicated region
      $region45: #{discriminator_forward.1} parent=43 // pred_check
        %p1442 = pneg %p166
      $region46: #{discriminator_forward.1} parent=43 // pred_check_branch
        %1444 = sbr.rel (%p1442) target = $region48
      $region47: #{discriminator_forward.1} parent=43 // pred_region
        _
      $region48: #{discriminator_forward.1} parent=43 // pred_fallthru
        _
    $region44: #{discriminator_forward.1} parent=5 // pred_fallthru
      _
    %p1445 = scmp.le.s32.totalorder 2, %s12
    // Predicated region
    $region49: #{discriminator_forward.1} parent=5 // pred_check
      %p1446 = pneg %p1445
    $region50: #{discriminator_forward.1} parent=5 // pred_check_branch
      %1448 = sbr.rel (%p1446) target = $region52
    $region51: #{discriminator_forward.1} parent=5 // pred_region
      %s1449 = ssub.s32 %s12, 2
      // Predicated region
      $region53: #{discriminator_forward.1} parent=51 // pred_check
        %p1450 = pneg %p172
      $region54: #{discriminator_forward.1} parent=51 // pred_check_branch
        %1452 = sbr.rel (%p1450) target = $region56
      $region55: #{discriminator_forward.1} parent=51 // pred_region
        %p1453 = scmp.lt.s32.totalorder %s18, 1
        %s1454 = scalar_select %p1453, %s18, 1
        %s1455 = scalar_lea.vmem %s6, %s1454
      $region56: #{discriminator_forward.1} parent=51 // pred_fallthru
        _
    $region52: #{discriminator_forward.1} parent=5 // pred_fallthru
      _
  $region6: #{discriminator_forward.1} parent=0 // loop_footer
    %s16 = sadd.s32 1, %s12
  $region7: #{discriminator_forward.1} parent=0 // loop_footer_branch
    %11 = sbr.rel target = $region3
  $region8: #{discriminator_forward.1} parent=0 // loop_exit
    _

</llo_original>
